<compile_context>
chip_gen: v5e
topology: v5e:2x2
jax: 0.10.0
libtpu: 0.0.40
codegen_flags: <defaults>
</compile_context>

<pallas_src>
import jax
import jax.numpy as jnp
import numpy as np
from jax.experimental import pallas as pl
from jax.experimental.pallas import tpu as pltpu


# ----------------------------------------------------------------------------
# Pallas kernel: embedding gather + full GRU stack + output Linear, all VMEM.
# ----------------------------------------------------------------------------
def decoder_kernel(*refs):
    # refs: trg, emb, h0, [wih_t, whh_t, bx, bhn] * L, wfc_t, bfc, pred, hn
    trg_ref, emb_ref, h0_ref = refs[0], refs[1], refs[2]
    L, B, H = h0_ref.shape
    layer_refs = refs[3:3 + 4 * L]
    wfc_ref, bfc_ref, pred_ref, hn_ref = refs[3 + 4 * L:]

    BT = trg_ref.shape[0]
    T = BT // B
    V = emb_ref.shape[0]

    # Fused embedding gather: one-hot (BT, V) @ (V, E) on the MXU.
    ids = trg_ref[...]                                           # (BT, 1) i32
    iota_v = jax.lax.broadcasted_iota(jnp.int32, (BT, V), 1)
    one_hot = (ids == iota_v).astype(jnp.float32)                # (BT, V)
    x = jnp.dot(one_hot, emb_ref[...],
                preferred_element_type=jnp.float32)              # (BT, E)

    for l in range(L):                       # static, tiny -> unrolled
        wih_t = layer_refs[4 * l][...]       # (in, 3H)
        whh_t = layer_refs[4 * l + 1][...]   # (H, 3H)
        bx = layer_refs[4 * l + 2][...]      # (1, 3H) folded input + r/z biases
        bhn = layer_refs[4 * l + 3][...]     # (1, H)  hidden bias of n gate

        # Hoisted input projection for the whole sequence: one fat matmul.
        gx_all = jnp.dot(x, wih_t, preferred_element_type=jnp.float32) + bx
        gx_all = gx_all.reshape(B, T, 3 * H)

        h = h0_ref[l]                        # (B, H), carried in vregs below
        outs = []
        for t in range(T):                   # static, small -> unrolled
            gx = gx_all[:, t, :]             # (B, 3H)
            gh = jnp.dot(h, whh_t, preferred_element_type=jnp.float32)
            rz = jax.nn.sigmoid(gx[:, :2 * H] + gh[:, :2 * H])
            r = rz[:, :H]
            z = rz[:, H:]
            n = jnp.tanh(gx[:, 2 * H:] + r * (gh[:, 2 * H:] + bhn))
            h = n + z * (h - n)              # == (1 - z) * n + z * h
            outs.append(h)

        hn_ref[l] = h
        # Single stacked handoff per layer (batch-major rows: b*T + t).
        x = jnp.stack(outs, axis=1).reshape(BT, H)

    # fc_out as one 2-D dot over the flattened sequence.
    pred_ref[...] = (
        jnp.dot(x, wfc_ref[...], preferred_element_type=jnp.float32)
        + bfc_ref[...]
    )


# ----------------------------------------------------------------------------
# One-time parameter packing (kept out of the per-call jit path).
# ----------------------------------------------------------------------------
def pack_decoder_params(params):
    H = params["whh"][0].shape[1]
    L = len(params["wih"])
    layers = []
    for l in range(L):
        wih_t = jnp.asarray(params["wih"][l]).T            # (in, 3H)
        whh_t = jnp.asarray(params["whh"][l]).T            # (H, 3H)
        bih = jnp.asarray(params["bih"][l])
        bhh = jnp.asarray(params["bhh"][l])
        # Fold b_ih (all gates) + b_hh (r, z gates) into the hoisted Gx bias.
        bx = jnp.concatenate(
            [bih[:2 * H] + bhh[:2 * H], bih[2 * H:]]).reshape(1, 3 * H)
        bhn = bhh[2 * H:].reshape(1, H)                    # b_hn stays per-step
        layers.append((wih_t, whh_t, bx, bhn))
    return {
        "emb": jnp.asarray(params["embedding"]),           # (V, E)
        "layers": layers,
        "wfc_t": jnp.asarray(params["fc_w"]).T,            # (H, V)
        "bfc": jnp.asarray(params["fc_b"]).reshape(1, -1), # (1, V)
    }


# ----------------------------------------------------------------------------
# Wrapper: one pallas_call, everything resident in VMEM (shapes are tiny).
# ----------------------------------------------------------------------------
@jax.jit
def decoder_forward(trg, hidden, packed):
    """trg: (B, T) int32, hidden: (L, B, H) f32 -> (preds (B,T,V), h_n (L,B,H))."""
    B, T = trg.shape
    L, _, H = hidden.shape
    V, _ = packed["emb"].shape

    trg_flat = trg.reshape(B * T, 1).astype(jnp.int32)     # free reshape

    layer_args = []
    for (wih_t, whh_t, bx, bhn) in packed["layers"]:
        layer_args += [wih_t, whh_t, bx, bhn]

    n_in = 3 + len(layer_args) + 2
    vmem = pl.BlockSpec(memory_space=pltpu.MemorySpace.VMEM)

    pred_flat, h_n = pl.pallas_call(
        decoder_kernel,
        out_shape=(
            jax.ShapeDtypeStruct((B * T, V), jnp.float32),
            jax.ShapeDtypeStruct((L, B, H), jnp.float32),
        ),
        in_specs=[vmem] * n_in,
        out_specs=(vmem, vmem),
    )(trg_flat, packed["emb"], hidden, *layer_args,
      packed["wfc_t"], packed["bfc"])

    return pred_flat.reshape(B, T, V), h_n


# ----------------------------------------------------------------------------
# Pure-JAX reference (mirrors torch.nn.GRU semantics) for a correctness check.
# ----------------------------------------------------------------------------
def decoder_reference(trg, hidden, params):
    emb = jnp.take(params["embedding"], trg, axis=0)
    x = emb
    L = hidden.shape[0]
    H = hidden.shape[-1]
    hn = []
    for l in range(L):
        Wih, Whh = params["wih"][l], params["whh"][l]
        bih, bhh = params["bih"][l], params["bhh"][l]
        h = hidden[l]
        outs = []
        for t in range(x.shape[1]):
            xt = x[:, t, :]
            gx = xt @ Wih.T + bih
            gh = h @ Whh.T + bhh
            r = jax.nn.sigmoid(gx[:, :H] + gh[:, :H])
            z = jax.nn.sigmoid(gx[:, H:2 * H] + gh[:, H:2 * H])
            n = jnp.tanh(gx[:, 2 * H:] + r * gh[:, 2 * H:])
            h = (1.0 - z) * n + z * h
            outs.append(h)
        x = jnp.stack(outs, axis=1)
        hn.append(h)
    preds = x @ params["fc_w"].T + params["fc_b"]
    return preds.astype(jnp.float32), jnp.stack(hn, axis=0)


if __name__ == "__main__":
    # output_dim (vocab) = 16, emb_dim = 32, hidden_dim = 32, n_layers = 2,
    # dropout = 0 (inference), batch = 2, seq = 8.
    V, E, H, L = 16, 32, 32, 2
    B, T = 2, 8

    key = jax.random.PRNGKey(0)
    keys = jax.random.split(key, 16)
    scale = 0.1

    params = {
        "embedding": scale * jax.random.normal(keys[0], (V, E), jnp.float32),
        "wih": [
            scale * jax.random.normal(keys[1], (3 * H, E), jnp.float32),
            scale * jax.random.normal(keys[2], (3 * H, H), jnp.float32),
        ],
        "whh": [
            scale * jax.random.normal(keys[3], (3 * H, H), jnp.float32),
            scale * jax.random.normal(keys[4], (3 * H, H), jnp.float32),
        ],
        "bih": [
            scale * jax.random.normal(keys[5], (3 * H,), jnp.float32),
            scale * jax.random.normal(keys[6], (3 * H,), jnp.float32),
        ],
        "bhh": [
            scale * jax.random.normal(keys[7], (3 * H,), jnp.float32),
            scale * jax.random.normal(keys[8], (3 * H,), jnp.float32),
        ],
        "fc_w": scale * jax.random.normal(keys[9], (V, H), jnp.float32),
        "fc_b": scale * jax.random.normal(keys[10], (V,), jnp.float32),
    }

    trg = jax.random.randint(keys[11], (B, T), 0, V, dtype=jnp.int32)
    hidden = scale * jax.random.normal(keys[12], (L, B, H), jnp.float32)

    packed = pack_decoder_params(params)   # once, outside the per-call path

    preds, h_n = decoder_forward(trg, hidden, packed)
    preds = jax.block_until_ready(preds)
    h_n = jax.block_until_ready(h_n)

    preds_ref, h_n_ref = decoder_reference(trg, hidden, params)
    assert preds.shape == (B, T, V) and preds.dtype == jnp.float32
    assert h_n.shape == (L, B, H)
    np.testing.assert_allclose(np.asarray(preds), np.asarray(preds_ref),
                               rtol=1e-4, atol=1e-4)
    np.testing.assert_allclose(np.asarray(h_n), np.asarray(h_n_ref),
                               rtol=1e-4, atol=1e-4)

    print("KERNEL_OK")
</pallas_src>

<mosaic_0001>
module attributes {stable_mosaic.version = 11 : i64} {
  func.func @decoder_kernel(%arg0: memref<16x1xi32, #tpu.memory_space<vmem>>, %arg1: memref<16x32xf32, #tpu.memory_space<vmem>>, %arg2: memref<2x2x32xf32, #tpu.memory_space<vmem>>, %arg3: memref<32x96xf32, #tpu.memory_space<vmem>>, %arg4: memref<32x96xf32, #tpu.memory_space<vmem>>, %arg5: memref<1x96xf32, #tpu.memory_space<vmem>>, %arg6: memref<1x32xf32, #tpu.memory_space<vmem>>, %arg7: memref<32x96xf32, #tpu.memory_space<vmem>>, %arg8: memref<32x96xf32, #tpu.memory_space<vmem>>, %arg9: memref<1x96xf32, #tpu.memory_space<vmem>>, %arg10: memref<1x32xf32, #tpu.memory_space<vmem>>, %arg11: memref<32x16xf32, #tpu.memory_space<vmem>>, %arg12: memref<1x16xf32, #tpu.memory_space<vmem>>, %arg13: memref<16x16xf32, #tpu.memory_space<vmem>>, %arg14: memref<2x2x32xf32, #tpu.memory_space<vmem>>) attributes {dimension_semantics = [], scalar_prefetch = 0 : i64, scratch_operands = 0 : i64, tpu.core_type = #tpu.core_type<tc>} {
    %c0 = arith.constant 0 : index
    %c0_0 = arith.constant 0 : index
    %0 = vector.load %arg0[%c0, %c0_0] : memref<16x1xi32, #tpu.memory_space<vmem>>, vector<16x1xi32>
    %1 = tpu.iota {dimensions = array<i32: 1>} : vector<16x16xi32>
    %2 = vector.broadcast %0 : vector<16x1xi32> to vector<16x16xi32>
    %3 = arith.cmpi eq, %2, %1 : vector<16x16xi32>
    %4 = arith.extui %3 : vector<16x16xi1> to vector<16x16xi32>
    %5 = arith.sitofp %4 : vector<16x16xi32> to vector<16x16xf32>
    %c0_1 = arith.constant 0 : index
    %c0_2 = arith.constant 0 : index
    %6 = vector.load %arg1[%c0_1, %c0_2] : memref<16x32xf32, #tpu.memory_space<vmem>>, vector<16x32xf32>
    %cst = arith.constant dense<0.000000e+00> : vector<16x32xf32>
    %7 = tpu.matmul %5, %6, %cst {dimension_numbers = #tpu.dot_dimension_numbers<[1], [0], [0], [1], [0, 0, 1, 1], [], []>} : vector<16x16xf32>, vector<16x32xf32>, vector<16x32xf32> -> vector<16x32xf32>
    %c0_3 = arith.constant 0 : index
    %c0_4 = arith.constant 0 : index
    %8 = vector.load %arg3[%c0_3, %c0_4] : memref<32x96xf32, #tpu.memory_space<vmem>>, vector<32x96xf32>
    %c0_5 = arith.constant 0 : index
    %c0_6 = arith.constant 0 : index
    %9 = vector.load %arg4[%c0_5, %c0_6] : memref<32x96xf32, #tpu.memory_space<vmem>>, vector<32x96xf32>
    %c0_7 = arith.constant 0 : index
    %c0_8 = arith.constant 0 : index
    %10 = vector.load %arg5[%c0_7, %c0_8] : memref<1x96xf32, #tpu.memory_space<vmem>>, vector<1x96xf32>
    %c0_9 = arith.constant 0 : index
    %c0_10 = arith.constant 0 : index
    %11 = vector.load %arg6[%c0_9, %c0_10] : memref<1x32xf32, #tpu.memory_space<vmem>>, vector<1x32xf32>
    %cst_11 = arith.constant dense<0.000000e+00> : vector<16x96xf32>
    %12 = tpu.matmul %7, %8, %cst_11 {dimension_numbers = #tpu.dot_dimension_numbers<[1], [0], [0], [1], [0, 0, 1, 1], [], []>} : vector<16x32xf32>, vector<32x96xf32>, vector<16x96xf32> -> vector<16x96xf32>
    %13 = vector.broadcast %10 : vector<1x96xf32> to vector<16x96xf32>
    %14 = arith.addf %12, %13 : vector<16x96xf32>
    %15 = vector.shape_cast %14 : vector<16x96xf32> to vector<2x8x96xf32>
    %c0_12 = arith.constant 0 : index
    %c0_13 = arith.constant 0 : index
    %c0_14 = arith.constant 0 : index
    %16 = vector.load %arg2[%c0_12, %c0_13, %c0_14] : memref<2x2x32xf32, #tpu.memory_space<vmem>>, vector<1x2x32xf32>
    %17 = vector.shape_cast %16 : vector<1x2x32xf32> to vector<2x32xf32>
    %18 = vector.extract_strided_slice %15 {offsets = [0, 0, 0], sizes = [2, 1, 96], strides = [1, 1, 1]} : vector<2x8x96xf32> to vector<2x1x96xf32>
    %19 = vector.shape_cast %18 : vector<2x1x96xf32> to vector<2x96xf32>
    %cst_15 = arith.constant dense<0.000000e+00> : vector<2x96xf32>
    %20 = tpu.matmul %17, %9, %cst_15 {dimension_numbers = #tpu.dot_dimension_numbers<[1], [0], [0], [1], [0, 0, 1, 1], [], []>} : vector<2x32xf32>, vector<32x96xf32>, vector<2x96xf32> -> vector<2x96xf32>
    %21 = vector.extract_strided_slice %19 {offsets = [0, 0], sizes = [2, 64], strides = [1, 1]} : vector<2x96xf32> to vector<2x64xf32>
    %22 = vector.extract_strided_slice %20 {offsets = [0, 0], sizes = [2, 64], strides = [1, 1]} : vector<2x96xf32> to vector<2x64xf32>
    %23 = arith.addf %21, %22 : vector<2x64xf32>
    %24 = arith.negf %23 : vector<2x64xf32>
    %25 = math.exp %24 : vector<2x64xf32>
    %cst_16 = arith.constant 1.000000e+00 : f32
    %26 = vector.broadcast %cst_16 : f32 to vector<2x64xf32>
    %27 = arith.addf %26, %25 : vector<2x64xf32>
    %28 = arith.divf %26, %27 : vector<2x64xf32>
    %29 = vector.extract_strided_slice %28 {offsets = [0, 0], sizes = [2, 32], strides = [1, 1]} : vector<2x64xf32> to vector<2x32xf32>
    %30 = vector.extract_strided_slice %28 {offsets = [0, 32], sizes = [2, 32], strides = [1, 1]} : vector<2x64xf32> to vector<2x32xf32>
    %31 = vector.extract_strided_slice %19 {offsets = [0, 64], sizes = [2, 32], strides = [1, 1]} : vector<2x96xf32> to vector<2x32xf32>
    %32 = vector.extract_strided_slice %20 {offsets = [0, 64], sizes = [2, 32], strides = [1, 1]} : vector<2x96xf32> to vector<2x32xf32>
    %33 = vector.broadcast %11 : vector<1x32xf32> to vector<2x32xf32>
    %34 = arith.addf %32, %33 : vector<2x32xf32>
    %35 = arith.mulf %29, %34 : vector<2x32xf32>
    %36 = arith.addf %31, %35 : vector<2x32xf32>
    %37 = math.tanh %36 : vector<2x32xf32>
    %38 = arith.subf %17, %37 : vector<2x32xf32>
    %39 = arith.mulf %30, %38 : vector<2x32xf32>
    %40 = arith.addf %37, %39 : vector<2x32xf32>
    %41 = vector.extract_strided_slice %15 {offsets = [0, 1, 0], sizes = [2, 1, 96], strides = [1, 1, 1]} : vector<2x8x96xf32> to vector<2x1x96xf32>
    %42 = vector.shape_cast %41 : vector<2x1x96xf32> to vector<2x96xf32>
    %cst_17 = arith.constant dense<0.000000e+00> : vector<2x96xf32>
    %43 = tpu.matmul %40, %9, %cst_17 {dimension_numbers = #tpu.dot_dimension_numbers<[1], [0], [0], [1], [0, 0, 1, 1], [], []>} : vector<2x32xf32>, vector<32x96xf32>, vector<2x96xf32> -> vector<2x96xf32>
    %44 = vector.extract_strided_slice %42 {offsets = [0, 0], sizes = [2, 64], strides = [1, 1]} : vector<2x96xf32> to vector<2x64xf32>
    %45 = vector.extract_strided_slice %43 {offsets = [0, 0], sizes = [2, 64], strides = [1, 1]} : vector<2x96xf32> to vector<2x64xf32>
    %46 = arith.addf %44, %45 : vector<2x64xf32>
    %47 = arith.negf %46 : vector<2x64xf32>
    %48 = math.exp %47 : vector<2x64xf32>
    %cst_18 = arith.constant 1.000000e+00 : f32
    %49 = vector.broadcast %cst_18 : f32 to vector<2x64xf32>
    %50 = arith.addf %49, %48 : vector<2x64xf32>
    %51 = arith.divf %49, %50 : vector<2x64xf32>
    %52 = vector.extract_strided_slice %51 {offsets = [0, 0], sizes = [2, 32], strides = [1, 1]} : vector<2x64xf32> to vector<2x32xf32>
    %53 = vector.extract_strided_slice %51 {offsets = [0, 32], sizes = [2, 32], strides = [1, 1]} : vector<2x64xf32> to vector<2x32xf32>
    %54 = vector.extract_strided_slice %42 {offsets = [0, 64], sizes = [2, 32], strides = [1, 1]} : vector<2x96xf32> to vector<2x32xf32>
    %55 = vector.extract_strided_slice %43 {offsets = [0, 64], sizes = [2, 32], strides = [1, 1]} : vector<2x96xf32> to vector<2x32xf32>
    %56 = vector.broadcast %11 : vector<1x32xf32> to vector<2x32xf32>
    %57 = arith.addf %55, %56 : vector<2x32xf32>
    %58 = arith.mulf %52, %57 : vector<2x32xf32>
    %59 = arith.addf %54, %58 : vector<2x32xf32>
    %60 = math.tanh %59 : vector<2x32xf32>
    %61 = arith.subf %40, %60 : vector<2x32xf32>
    %62 = arith.mulf %53, %61 : vector<2x32xf32>
    %63 = arith.addf %60, %62 : vector<2x32xf32>
    %64 = vector.extract_strided_slice %15 {offsets = [0, 2, 0], sizes = [2, 1, 96], strides = [1, 1, 1]} : vector<2x8x96xf32> to vector<2x1x96xf32>
    %65 = vector.shape_cast %64 : vector<2x1x96xf32> to vector<2x96xf32>
    %cst_19 = arith.constant dense<0.000000e+00> : vector<2x96xf32>
    %66 = tpu.matmul %63, %9, %cst_19 {dimension_numbers = #tpu.dot_dimension_numbers<[1], [0], [0], [1], [0, 0, 1, 1], [], []>} : vector<2x32xf32>, vector<32x96xf32>, vector<2x96xf32> -> vector<2x96xf32>
    %67 = vector.extract_strided_slice %65 {offsets = [0, 0], sizes = [2, 64], strides = [1, 1]} : vector<2x96xf32> to vector<2x64xf32>
    %68 = vector.extract_strided_slice %66 {offsets = [0, 0], sizes = [2, 64], strides = [1, 1]} : vector<2x96xf32> to vector<2x64xf32>
    %69 = arith.addf %67, %68 : vector<2x64xf32>
    %70 = arith.negf %69 : vector<2x64xf32>
    %71 = math.exp %70 : vector<2x64xf32>
    %cst_20 = arith.constant 1.000000e+00 : f32
    %72 = vector.broadcast %cst_20 : f32 to vector<2x64xf32>
    %73 = arith.addf %72, %71 : vector<2x64xf32>
    %74 = arith.divf %72, %73 : vector<2x64xf32>
    %75 = vector.extract_strided_slice %74 {offsets = [0, 0], sizes = [2, 32], strides = [1, 1]} : vector<2x64xf32> to vector<2x32xf32>
    %76 = vector.extract_strided_slice %74 {offsets = [0, 32], sizes = [2, 32], strides = [1, 1]} : vector<2x64xf32> to vector<2x32xf32>
    %77 = vector.extract_strided_slice %65 {offsets = [0, 64], sizes = [2, 32], strides = [1, 1]} : vector<2x96xf32> to vector<2x32xf32>
    %78 = vector.extract_strided_slice %66 {offsets = [0, 64], sizes = [2, 32], strides = [1, 1]} : vector<2x96xf32> to vector<2x32xf32>
    %79 = vector.broadcast %11 : vector<1x32xf32> to vector<2x32xf32>
    %80 = arith.addf %78, %79 : vector<2x32xf32>
    %81 = arith.mulf %75, %80 : vector<2x32xf32>
    %82 = arith.addf %77, %81 : vector<2x32xf32>
    %83 = math.tanh %82 : vector<2x32xf32>
    %84 = arith.subf %63, %83 : vector<2x32xf32>
    %85 = arith.mulf %76, %84 : vector<2x32xf32>
    %86 = arith.addf %83, %85 : vector<2x32xf32>
    %87 = vector.extract_strided_slice %15 {offsets = [0, 3, 0], sizes = [2, 1, 96], strides = [1, 1, 1]} : vector<2x8x96xf32> to vector<2x1x96xf32>
    %88 = vector.shape_cast %87 : vector<2x1x96xf32> to vector<2x96xf32>
    %cst_21 = arith.constant dense<0.000000e+00> : vector<2x96xf32>
    %89 = tpu.matmul %86, %9, %cst_21 {dimension_numbers = #tpu.dot_dimension_numbers<[1], [0], [0], [1], [0, 0, 1, 1], [], []>} : vector<2x32xf32>, vector<32x96xf32>, vector<2x96xf32> -> vector<2x96xf32>
    %90 = vector.extract_strided_slice %88 {offsets = [0, 0], sizes = [2, 64], strides = [1, 1]} : vector<2x96xf32> to vector<2x64xf32>
    %91 = vector.extract_strided_slice %89 {offsets = [0, 0], sizes = [2, 64], strides = [1, 1]} : vector<2x96xf32> to vector<2x64xf32>
    %92 = arith.addf %90, %91 : vector<2x64xf32>
    %93 = arith.negf %92 : vector<2x64xf32>
    %94 = math.exp %93 : vector<2x64xf32>
    %cst_22 = arith.constant 1.000000e+00 : f32
    %95 = vector.broadcast %cst_22 : f32 to vector<2x64xf32>
    %96 = arith.addf %95, %94 : vector<2x64xf32>
    %97 = arith.divf %95, %96 : vector<2x64xf32>
    %98 = vector.extract_strided_slice %97 {offsets = [0, 0], sizes = [2, 32], strides = [1, 1]} : vector<2x64xf32> to vector<2x32xf32>
    %99 = vector.extract_strided_slice %97 {offsets = [0, 32], sizes = [2, 32], strides = [1, 1]} : vector<2x64xf32> to vector<2x32xf32>
    %100 = vector.extract_strided_slice %88 {offsets = [0, 64], sizes = [2, 32], strides = [1, 1]} : vector<2x96xf32> to vector<2x32xf32>
    %101 = vector.extract_strided_slice %89 {offsets = [0, 64], sizes = [2, 32], strides = [1, 1]} : vector<2x96xf32> to vector<2x32xf32>
    %102 = vector.broadcast %11 : vector<1x32xf32> to vector<2x32xf32>
    %103 = arith.addf %101, %102 : vector<2x32xf32>
    %104 = arith.mulf %98, %103 : vector<2x32xf32>
    %105 = arith.addf %100, %104 : vector<2x32xf32>
    %106 = math.tanh %105 : vector<2x32xf32>
    %107 = arith.subf %86, %106 : vector<2x32xf32>
    %108 = arith.mulf %99, %107 : vector<2x32xf32>
    %109 = arith.addf %106, %108 : vector<2x32xf32>
    %110 = vector.extract_strided_slice %15 {offsets = [0, 4, 0], sizes = [2, 1, 96], strides = [1, 1, 1]} : vector<2x8x96xf32> to vector<2x1x96xf32>
    %111 = vector.shape_cast %110 : vector<2x1x96xf32> to vector<2x96xf32>
    %cst_23 = arith.constant dense<0.000000e+00> : vector<2x96xf32>
    %112 = tpu.matmul %109, %9, %cst_23 {dimension_numbers = #tpu.dot_dimension_numbers<[1], [0], [0], [1], [0, 0, 1, 1], [], []>} : vector<2x32xf32>, vector<32x96xf32>, vector<2x96xf32> -> vector<2x96xf32>
    %113 = vector.extract_strided_slice %111 {offsets = [0, 0], sizes = [2, 64], strides = [1, 1]} : vector<2x96xf32> to vector<2x64xf32>
    %114 = vector.extract_strided_slice %112 {offsets = [0, 0], sizes = [2, 64], strides = [1, 1]} : vector<2x96xf32> to vector<2x64xf32>
    %115 = arith.addf %113, %114 : vector<2x64xf32>
    %116 = arith.negf %115 : vector<2x64xf32>
    %117 = math.exp %116 : vector<2x64xf32>
    %cst_24 = arith.constant 1.000000e+00 : f32
    %118 = vector.broadcast %cst_24 : f32 to vector<2x64xf32>
    %119 = arith.addf %118, %117 : vector<2x64xf32>
    %120 = arith.divf %118, %119 : vector<2x64xf32>
    %121 = vector.extract_strided_slice %120 {offsets = [0, 0], sizes = [2, 32], strides = [1, 1]} : vector<2x64xf32> to vector<2x32xf32>
    %122 = vector.extract_strided_slice %120 {offsets = [0, 32], sizes = [2, 32], strides = [1, 1]} : vector<2x64xf32> to vector<2x32xf32>
    %123 = vector.extract_strided_slice %111 {offsets = [0, 64], sizes = [2, 32], strides = [1, 1]} : vector<2x96xf32> to vector<2x32xf32>
    %124 = vector.extract_strided_slice %112 {offsets = [0, 64], sizes = [2, 32], strides = [1, 1]} : vector<2x96xf32> to vector<2x32xf32>
    %125 = vector.broadcast %11 : vector<1x32xf32> to vector<2x32xf32>
    %126 = arith.addf %124, %125 : vector<2x32xf32>
    %127 = arith.mulf %121, %126 : vector<2x32xf32>
    %128 = arith.addf %123, %127 : vector<2x32xf32>
    %129 = math.tanh %128 : vector<2x32xf32>
    %130 = arith.subf %109, %129 : vector<2x32xf32>
    %131 = arith.mulf %122, %130 : vector<2x32xf32>
    %132 = arith.addf %129, %131 : vector<2x32xf32>
    %133 = vector.extract_strided_slice %15 {offsets = [0, 5, 0], sizes = [2, 1, 96], strides = [1, 1, 1]} : vector<2x8x96xf32> to vector<2x1x96xf32>
    %134 = vector.shape_cast %133 : vector<2x1x96xf32> to vector<2x96xf32>
    %cst_25 = arith.constant dense<0.000000e+00> : vector<2x96xf32>
    %135 = tpu.matmul %132, %9, %cst_25 {dimension_numbers = #tpu.dot_dimension_numbers<[1], [0], [0], [1], [0, 0, 1, 1], [], []>} : vector<2x32xf32>, vector<32x96xf32>, vector<2x96xf32> -> vector<2x96xf32>
    %136 = vector.extract_strided_slice %134 {offsets = [0, 0], sizes = [2, 64], strides = [1, 1]} : vector<2x96xf32> to vector<2x64xf32>
    %137 = vector.extract_strided_slice %135 {offsets = [0, 0], sizes = [2, 64], strides = [1, 1]} : vector<2x96xf32> to vector<2x64xf32>
    %138 = arith.addf %136, %137 : vector<2x64xf32>
    %139 = arith.negf %138 : vector<2x64xf32>
    %140 = math.exp %139 : vector<2x64xf32>
    %cst_26 = arith.constant 1.000000e+00 : f32
    %141 = vector.broadcast %cst_26 : f32 to vector<2x64xf32>
    %142 = arith.addf %141, %140 : vector<2x64xf32>
    %143 = arith.divf %141, %142 : vector<2x64xf32>
    %144 = vector.extract_strided_slice %143 {offsets = [0, 0], sizes = [2, 32], strides = [1, 1]} : vector<2x64xf32> to vector<2x32xf32>
    %145 = vector.extract_strided_slice %143 {offsets = [0, 32], sizes = [2, 32], strides = [1, 1]} : vector<2x64xf32> to vector<2x32xf32>
    %146 = vector.extract_strided_slice %134 {offsets = [0, 64], sizes = [2, 32], strides = [1, 1]} : vector<2x96xf32> to vector<2x32xf32>
    %147 = vector.extract_strided_slice %135 {offsets = [0, 64], sizes = [2, 32], strides = [1, 1]} : vector<2x96xf32> to vector<2x32xf32>
    %148 = vector.broadcast %11 : vector<1x32xf32> to vector<2x32xf32>
    %149 = arith.addf %147, %148 : vector<2x32xf32>
    %150 = arith.mulf %144, %149 : vector<2x32xf32>
    %151 = arith.addf %146, %150 : vector<2x32xf32>
    %152 = math.tanh %151 : vector<2x32xf32>
    %153 = arith.subf %132, %152 : vector<2x32xf32>
    %154 = arith.mulf %145, %153 : vector<2x32xf32>
    %155 = arith.addf %152, %154 : vector<2x32xf32>
    %156 = vector.extract_strided_slice %15 {offsets = [0, 6, 0], sizes = [2, 1, 96], strides = [1, 1, 1]} : vector<2x8x96xf32> to vector<2x1x96xf32>
    %157 = vector.shape_cast %156 : vector<2x1x96xf32> to vector<2x96xf32>
    %cst_27 = arith.constant dense<0.000000e+00> : vector<2x96xf32>
    %158 = tpu.matmul %155, %9, %cst_27 {dimension_numbers = #tpu.dot_dimension_numbers<[1], [0], [0], [1], [0, 0, 1, 1], [], []>} : vector<2x32xf32>, vector<32x96xf32>, vector<2x96xf32> -> vector<2x96xf32>
    %159 = vector.extract_strided_slice %157 {offsets = [0, 0], sizes = [2, 64], strides = [1, 1]} : vector<2x96xf32> to vector<2x64xf32>
    %160 = vector.extract_strided_slice %158 {offsets = [0, 0], sizes = [2, 64], strides = [1, 1]} : vector<2x96xf32> to vector<2x64xf32>
    %161 = arith.addf %159, %160 : vector<2x64xf32>
    %162 = arith.negf %161 : vector<2x64xf32>
    %163 = math.exp %162 : vector<2x64xf32>
    %cst_28 = arith.constant 1.000000e+00 : f32
    %164 = vector.broadcast %cst_28 : f32 to vector<2x64xf32>
    %165 = arith.addf %164, %163 : vector<2x64xf32>
    %166 = arith.divf %164, %165 : vector<2x64xf32>
    %167 = vector.extract_strided_slice %166 {offsets = [0, 0], sizes = [2, 32], strides = [1, 1]} : vector<2x64xf32> to vector<2x32xf32>
    %168 = vector.extract_strided_slice %166 {offsets = [0, 32], sizes = [2, 32], strides = [1, 1]} : vector<2x64xf32> to vector<2x32xf32>
    %169 = vector.extract_strided_slice %157 {offsets = [0, 64], sizes = [2, 32], strides = [1, 1]} : vector<2x96xf32> to vector<2x32xf32>
    %170 = vector.extract_strided_slice %158 {offsets = [0, 64], sizes = [2, 32], strides = [1, 1]} : vector<2x96xf32> to vector<2x32xf32>
    %171 = vector.broadcast %11 : vector<1x32xf32> to vector<2x32xf32>
    %172 = arith.addf %170, %171 : vector<2x32xf32>
    %173 = arith.mulf %167, %172 : vector<2x32xf32>
    %174 = arith.addf %169, %173 : vector<2x32xf32>
    %175 = math.tanh %174 : vector<2x32xf32>
    %176 = arith.subf %155, %175 : vector<2x32xf32>
    %177 = arith.mulf %168, %176 : vector<2x32xf32>
    %178 = arith.addf %175, %177 : vector<2x32xf32>
    %179 = vector.extract_strided_slice %15 {offsets = [0, 7, 0], sizes = [2, 1, 96], strides = [1, 1, 1]} : vector<2x8x96xf32> to vector<2x1x96xf32>
    %180 = vector.shape_cast %179 : vector<2x1x96xf32> to vector<2x96xf32>
    %cst_29 = arith.constant dense<0.000000e+00> : vector<2x96xf32>
    %181 = tpu.matmul %178, %9, %cst_29 {dimension_numbers = #tpu.dot_dimension_numbers<[1], [0], [0], [1], [0, 0, 1, 1], [], []>} : vector<2x32xf32>, vector<32x96xf32>, vector<2x96xf32> -> vector<2x96xf32>
    %182 = vector.extract_strided_slice %180 {offsets = [0, 0], sizes = [2, 64], strides = [1, 1]} : vector<2x96xf32> to vector<2x64xf32>
    %183 = vector.extract_strided_slice %181 {offsets = [0, 0], sizes = [2, 64], strides = [1, 1]} : vector<2x96xf32> to vector<2x64xf32>
    %184 = arith.addf %182, %183 : vector<2x64xf32>
    %185 = arith.negf %184 : vector<2x64xf32>
    %186 = math.exp %185 : vector<2x64xf32>
    %cst_30 = arith.constant 1.000000e+00 : f32
    %187 = vector.broadcast %cst_30 : f32 to vector<2x64xf32>
    %188 = arith.addf %187, %186 : vector<2x64xf32>
    %189 = arith.divf %187, %188 : vector<2x64xf32>
    %190 = vector.extract_strided_slice %189 {offsets = [0, 0], sizes = [2, 32], strides = [1, 1]} : vector<2x64xf32> to vector<2x32xf32>
    %191 = vector.extract_strided_slice %189 {offsets = [0, 32], sizes = [2, 32], strides = [1, 1]} : vector<2x64xf32> to vector<2x32xf32>
    %192 = vector.extract_strided_slice %180 {offsets = [0, 64], sizes = [2, 32], strides = [1, 1]} : vector<2x96xf32> to vector<2x32xf32>
    %193 = vector.extract_strided_slice %181 {offsets = [0, 64], sizes = [2, 32], strides = [1, 1]} : vector<2x96xf32> to vector<2x32xf32>
    %194 = vector.broadcast %11 : vector<1x32xf32> to vector<2x32xf32>
    %195 = arith.addf %193, %194 : vector<2x32xf32>
    %196 = arith.mulf %190, %195 : vector<2x32xf32>
    %197 = arith.addf %192, %196 : vector<2x32xf32>
    %198 = math.tanh %197 : vector<2x32xf32>
    %199 = arith.subf %178, %198 : vector<2x32xf32>
    %200 = arith.mulf %191, %199 : vector<2x32xf32>
    %201 = arith.addf %198, %200 : vector<2x32xf32>
    %c0_31 = arith.constant 0 : index
    %c0_32 = arith.constant 0 : index
    %c0_33 = arith.constant 0 : index
    %202 = vector.load %arg14[%c0_31, %c0_32, %c0_33] : memref<2x2x32xf32, #tpu.memory_space<vmem>>, vector<1x2x32xf32>
    %203 = vector.shape_cast %202 : vector<1x2x32xf32> to vector<2x32xf32>
    %204 = vector.shape_cast %201 : vector<2x32xf32> to vector<1x2x32xf32>
    tpu.vector_store %arg14[%c0_31, %c0_32, %c0_33], %204 {strides = array<i32>} : memref<2x2x32xf32, #tpu.memory_space<vmem>>, vector<1x2x32xf32>,
    %205 = vector.shape_cast %40 : vector<2x32xf32> to vector<2x1x32xf32>
    %206 = vector.shape_cast %63 : vector<2x32xf32> to vector<2x1x32xf32>
    %207 = vector.shape_cast %86 : vector<2x32xf32> to vector<2x1x32xf32>
    %208 = vector.shape_cast %109 : vector<2x32xf32> to vector<2x1x32xf32>
    %209 = vector.shape_cast %132 : vector<2x32xf32> to vector<2x1x32xf32>
    %210 = vector.shape_cast %155 : vector<2x32xf32> to vector<2x1x32xf32>
    %211 = vector.shape_cast %178 : vector<2x32xf32> to vector<2x1x32xf32>
    %212 = vector.shape_cast %201 : vector<2x32xf32> to vector<2x1x32xf32>
    %213 = tpu.concatenate %205, %206, %207, %208, %209, %210, %211, %212 in 1 : vector<2x1x32xf32>, vector<2x1x32xf32>, vector<2x1x32xf32>, vector<2x1x32xf32>, vector<2x1x32xf32>, vector<2x1x32xf32>, vector<2x1x32xf32>, vector<2x1x32xf32> -> vector<2x8x32xf32>
    %214 = vector.shape_cast %213 : vector<2x8x32xf32> to vector<16x32xf32>
    %c0_34 = arith.constant 0 : index
    %c0_35 = arith.constant 0 : index
    %215 = vector.load %arg7[%c0_34, %c0_35] : memref<32x96xf32, #tpu.memory_space<vmem>>, vector<32x96xf32>
    %c0_36 = arith.constant 0 : index
    %c0_37 = arith.constant 0 : index
    %216 = vector.load %arg8[%c0_36, %c0_37] : memref<32x96xf32, #tpu.memory_space<vmem>>, vector<32x96xf32>
    %c0_38 = arith.constant 0 : index
    %c0_39 = arith.constant 0 : index
    %217 = vector.load %arg9[%c0_38, %c0_39] : memref<1x96xf32, #tpu.memory_space<vmem>>, vector<1x96xf32>
    %c0_40 = arith.constant 0 : index
    %c0_41 = arith.constant 0 : index
    %218 = vector.load %arg10[%c0_40, %c0_41] : memref<1x32xf32, #tpu.memory_space<vmem>>, vector<1x32xf32>
    %cst_42 = arith.constant dense<0.000000e+00> : vector<16x96xf32>
    %219 = tpu.matmul %214, %215, %cst_42 {dimension_numbers = #tpu.dot_dimension_numbers<[1], [0], [0], [1], [0, 0, 1, 1], [], []>} : vector<16x32xf32>, vector<32x96xf32>, vector<16x96xf32> -> vector<16x96xf32>
    %220 = vector.broadcast %217 : vector<1x96xf32> to vector<16x96xf32>
    %221 = arith.addf %219, %220 : vector<16x96xf32>
    %222 = vector.shape_cast %221 : vector<16x96xf32> to vector<2x8x96xf32>
    %c1 = arith.constant 1 : index
    %c0_43 = arith.constant 0 : index
    %c0_44 = arith.constant 0 : index
    %223 = vector.load %arg2[%c1, %c0_43, %c0_44] : memref<2x2x32xf32, #tpu.memory_space<vmem>>, vector<1x2x32xf32>
    %224 = vector.shape_cast %223 : vector<1x2x32xf32> to vector<2x32xf32>
    %225 = vector.extract_strided_slice %222 {offsets = [0, 0, 0], sizes = [2, 1, 96], strides = [1, 1, 1]} : vector<2x8x96xf32> to vector<2x1x96xf32>
    %226 = vector.shape_cast %225 : vector<2x1x96xf32> to vector<2x96xf32>
    %cst_45 = arith.constant dense<0.000000e+00> : vector<2x96xf32>
    %227 = tpu.matmul %224, %216, %cst_45 {dimension_numbers = #tpu.dot_dimension_numbers<[1], [0], [0], [1], [0, 0, 1, 1], [], []>} : vector<2x32xf32>, vector<32x96xf32>, vector<2x96xf32> -> vector<2x96xf32>
    %228 = vector.extract_strided_slice %226 {offsets = [0, 0], sizes = [2, 64], strides = [1, 1]} : vector<2x96xf32> to vector<2x64xf32>
    %229 = vector.extract_strided_slice %227 {offsets = [0, 0], sizes = [2, 64], strides = [1, 1]} : vector<2x96xf32> to vector<2x64xf32>
    %230 = arith.addf %228, %229 : vector<2x64xf32>
    %231 = arith.negf %230 : vector<2x64xf32>
    %232 = math.exp %231 : vector<2x64xf32>
    %cst_46 = arith.constant 1.000000e+00 : f32
    %233 = vector.broadcast %cst_46 : f32 to vector<2x64xf32>
    %234 = arith.addf %233, %232 : vector<2x64xf32>
    %235 = arith.divf %233, %234 : vector<2x64xf32>
    %236 = vector.extract_strided_slice %235 {offsets = [0, 0], sizes = [2, 32], strides = [1, 1]} : vector<2x64xf32> to vector<2x32xf32>
    %237 = vector.extract_strided_slice %235 {offsets = [0, 32], sizes = [2, 32], strides = [1, 1]} : vector<2x64xf32> to vector<2x32xf32>
    %238 = vector.extract_strided_slice %226 {offsets = [0, 64], sizes = [2, 32], strides = [1, 1]} : vector<2x96xf32> to vector<2x32xf32>
    %239 = vector.extract_strided_slice %227 {offsets = [0, 64], sizes = [2, 32], strides = [1, 1]} : vector<2x96xf32> to vector<2x32xf32>
    %240 = vector.broadcast %218 : vector<1x32xf32> to vector<2x32xf32>
    %241 = arith.addf %239, %240 : vector<2x32xf32>
    %242 = arith.mulf %236, %241 : vector<2x32xf32>
    %243 = arith.addf %238, %242 : vector<2x32xf32>
    %244 = math.tanh %243 : vector<2x32xf32>
    %245 = arith.subf %224, %244 : vector<2x32xf32>
    %246 = arith.mulf %237, %245 : vector<2x32xf32>
    %247 = arith.addf %244, %246 : vector<2x32xf32>
    %248 = vector.extract_strided_slice %222 {offsets = [0, 1, 0], sizes = [2, 1, 96], strides = [1, 1, 1]} : vector<2x8x96xf32> to vector<2x1x96xf32>
    %249 = vector.shape_cast %248 : vector<2x1x96xf32> to vector<2x96xf32>
    %cst_47 = arith.constant dense<0.000000e+00> : vector<2x96xf32>
    %250 = tpu.matmul %247, %216, %cst_47 {dimension_numbers = #tpu.dot_dimension_numbers<[1], [0], [0], [1], [0, 0, 1, 1], [], []>} : vector<2x32xf32>, vector<32x96xf32>, vector<2x96xf32> -> vector<2x96xf32>
    %251 = vector.extract_strided_slice %249 {offsets = [0, 0], sizes = [2, 64], strides = [1, 1]} : vector<2x96xf32> to vector<2x64xf32>
    %252 = vector.extract_strided_slice %250 {offsets = [0, 0], sizes = [2, 64], strides = [1, 1]} : vector<2x96xf32> to vector<2x64xf32>
    %253 = arith.addf %251, %252 : vector<2x64xf32>
    %254 = arith.negf %253 : vector<2x64xf32>
    %255 = math.exp %254 : vector<2x64xf32>
    %cst_48 = arith.constant 1.000000e+00 : f32
    %256 = vector.broadcast %cst_48 : f32 to vector<2x64xf32>
    %257 = arith.addf %256, %255 : vector<2x64xf32>
    %258 = arith.divf %256, %257 : vector<2x64xf32>
    %259 = vector.extract_strided_slice %258 {offsets = [0, 0], sizes = [2, 32], strides = [1, 1]} : vector<2x64xf32> to vector<2x32xf32>
    %260 = vector.extract_strided_slice %258 {offsets = [0, 32], sizes = [2, 32], strides = [1, 1]} : vector<2x64xf32> to vector<2x32xf32>
    %261 = vector.extract_strided_slice %249 {offsets = [0, 64], sizes = [2, 32], strides = [1, 1]} : vector<2x96xf32> to vector<2x32xf32>
    %262 = vector.extract_strided_slice %250 {offsets = [0, 64], sizes = [2, 32], strides = [1, 1]} : vector<2x96xf32> to vector<2x32xf32>
    %263 = vector.broadcast %218 : vector<1x32xf32> to vector<2x32xf32>
    %264 = arith.addf %262, %263 : vector<2x32xf32>
    %265 = arith.mulf %259, %264 : vector<2x32xf32>
    %266 = arith.addf %261, %265 : vector<2x32xf32>
    %267 = math.tanh %266 : vector<2x32xf32>
    %268 = arith.subf %247, %267 : vector<2x32xf32>
    %269 = arith.mulf %260, %268 : vector<2x32xf32>
    %270 = arith.addf %267, %269 : vector<2x32xf32>
    %271 = vector.extract_strided_slice %222 {offsets = [0, 2, 0], sizes = [2, 1, 96], strides = [1, 1, 1]} : vector<2x8x96xf32> to vector<2x1x96xf32>
    %272 = vector.shape_cast %271 : vector<2x1x96xf32> to vector<2x96xf32>
    %cst_49 = arith.constant dense<0.000000e+00> : vector<2x96xf32>
    %273 = tpu.matmul %270, %216, %cst_49 {dimension_numbers = #tpu.dot_dimension_numbers<[1], [0], [0], [1], [0, 0, 1, 1], [], []>} : vector<2x32xf32>, vector<32x96xf32>, vector<2x96xf32> -> vector<2x96xf32>
    %274 = vector.extract_strided_slice %272 {offsets = [0, 0], sizes = [2, 64], strides = [1, 1]} : vector<2x96xf32> to vector<2x64xf32>
    %275 = vector.extract_strided_slice %273 {offsets = [0, 0], sizes = [2, 64], strides = [1, 1]} : vector<2x96xf32> to vector<2x64xf32>
    %276 = arith.addf %274, %275 : vector<2x64xf32>
    %277 = arith.negf %276 : vector<2x64xf32>
    %278 = math.exp %277 : vector<2x64xf32>
    %cst_50 = arith.constant 1.000000e+00 : f32
    %279 = vector.broadcast %cst_50 : f32 to vector<2x64xf32>
    %280 = arith.addf %279, %278 : vector<2x64xf32>
    %281 = arith.divf %279, %280 : vector<2x64xf32>
    %282 = vector.extract_strided_slice %281 {offsets = [0, 0], sizes = [2, 32], strides = [1, 1]} : vector<2x64xf32> to vector<2x32xf32>
    %283 = vector.extract_strided_slice %281 {offsets = [0, 32], sizes = [2, 32], strides = [1, 1]} : vector<2x64xf32> to vector<2x32xf32>
    %284 = vector.extract_strided_slice %272 {offsets = [0, 64], sizes = [2, 32], strides = [1, 1]} : vector<2x96xf32> to vector<2x32xf32>
    %285 = vector.extract_strided_slice %273 {offsets = [0, 64], sizes = [2, 32], strides = [1, 1]} : vector<2x96xf32> to vector<2x32xf32>
    %286 = vector.broadcast %218 : vector<1x32xf32> to vector<2x32xf32>
    %287 = arith.addf %285, %286 : vector<2x32xf32>
    %288 = arith.mulf %282, %287 : vector<2x32xf32>
    %289 = arith.addf %284, %288 : vector<2x32xf32>
    %290 = math.tanh %289 : vector<2x32xf32>
    %291 = arith.subf %270, %290 : vector<2x32xf32>
    %292 = arith.mulf %283, %291 : vector<2x32xf32>
    %293 = arith.addf %290, %292 : vector<2x32xf32>
    %294 = vector.extract_strided_slice %222 {offsets = [0, 3, 0], sizes = [2, 1, 96], strides = [1, 1, 1]} : vector<2x8x96xf32> to vector<2x1x96xf32>
    %295 = vector.shape_cast %294 : vector<2x1x96xf32> to vector<2x96xf32>
    %cst_51 = arith.constant dense<0.000000e+00> : vector<2x96xf32>
    %296 = tpu.matmul %293, %216, %cst_51 {dimension_numbers = #tpu.dot_dimension_numbers<[1], [0], [0], [1], [0, 0, 1, 1], [], []>} : vector<2x32xf32>, vector<32x96xf32>, vector<2x96xf32> -> vector<2x96xf32>
    %297 = vector.extract_strided_slice %295 {offsets = [0, 0], sizes = [2, 64], strides = [1, 1]} : vector<2x96xf32> to vector<2x64xf32>
    %298 = vector.extract_strided_slice %296 {offsets = [0, 0], sizes = [2, 64], strides = [1, 1]} : vector<2x96xf32> to vector<2x64xf32>
    %299 = arith.addf %297, %298 : vector<2x64xf32>
    %300 = arith.negf %299 : vector<2x64xf32>
    %301 = math.exp %300 : vector<2x64xf32>
    %cst_52 = arith.constant 1.000000e+00 : f32
    %302 = vector.broadcast %cst_52 : f32 to vector<2x64xf32>
    %303 = arith.addf %302, %301 : vector<2x64xf32>
    %304 = arith.divf %302, %303 : vector<2x64xf32>
    %305 = vector.extract_strided_slice %304 {offsets = [0, 0], sizes = [2, 32], strides = [1, 1]} : vector<2x64xf32> to vector<2x32xf32>
    %306 = vector.extract_strided_slice %304 {offsets = [0, 32], sizes = [2, 32], strides = [1, 1]} : vector<2x64xf32> to vector<2x32xf32>
    %307 = vector.extract_strided_slice %295 {offsets = [0, 64], sizes = [2, 32], strides = [1, 1]} : vector<2x96xf32> to vector<2x32xf32>
    %308 = vector.extract_strided_slice %296 {offsets = [0, 64], sizes = [2, 32], strides = [1, 1]} : vector<2x96xf32> to vector<2x32xf32>
    %309 = vector.broadcast %218 : vector<1x32xf32> to vector<2x32xf32>
    %310 = arith.addf %308, %309 : vector<2x32xf32>
    %311 = arith.mulf %305, %310 : vector<2x32xf32>
    %312 = arith.addf %307, %311 : vector<2x32xf32>
    %313 = math.tanh %312 : vector<2x32xf32>
    %314 = arith.subf %293, %313 : vector<2x32xf32>
    %315 = arith.mulf %306, %314 : vector<2x32xf32>
    %316 = arith.addf %313, %315 : vector<2x32xf32>
    %317 = vector.extract_strided_slice %222 {offsets = [0, 4, 0], sizes = [2, 1, 96], strides = [1, 1, 1]} : vector<2x8x96xf32> to vector<2x1x96xf32>
    %318 = vector.shape_cast %317 : vector<2x1x96xf32> to vector<2x96xf32>
    %cst_53 = arith.constant dense<0.000000e+00> : vector<2x96xf32>
    %319 = tpu.matmul %316, %216, %cst_53 {dimension_numbers = #tpu.dot_dimension_numbers<[1], [0], [0], [1], [0, 0, 1, 1], [], []>} : vector<2x32xf32>, vector<32x96xf32>, vector<2x96xf32> -> vector<2x96xf32>
    %320 = vector.extract_strided_slice %318 {offsets = [0, 0], sizes = [2, 64], strides = [1, 1]} : vector<2x96xf32> to vector<2x64xf32>
    %321 = vector.extract_strided_slice %319 {offsets = [0, 0], sizes = [2, 64], strides = [1, 1]} : vector<2x96xf32> to vector<2x64xf32>
    %322 = arith.addf %320, %321 : vector<2x64xf32>
    %323 = arith.negf %322 : vector<2x64xf32>
    %324 = math.exp %323 : vector<2x64xf32>
    %cst_54 = arith.constant 1.000000e+00 : f32
    %325 = vector.broadcast %cst_54 : f32 to vector<2x64xf32>
    %326 = arith.addf %325, %324 : vector<2x64xf32>
    %327 = arith.divf %325, %326 : vector<2x64xf32>
    %328 = vector.extract_strided_slice %327 {offsets = [0, 0], sizes = [2, 32], strides = [1, 1]} : vector<2x64xf32> to vector<2x32xf32>
    %329 = vector.extract_strided_slice %327 {offsets = [0, 32], sizes = [2, 32], strides = [1, 1]} : vector<2x64xf32> to vector<2x32xf32>
    %330 = vector.extract_strided_slice %318 {offsets = [0, 64], sizes = [2, 32], strides = [1, 1]} : vector<2x96xf32> to vector<2x32xf32>
    %331 = vector.extract_strided_slice %319 {offsets = [0, 64], sizes = [2, 32], strides = [1, 1]} : vector<2x96xf32> to vector<2x32xf32>
    %332 = vector.broadcast %218 : vector<1x32xf32> to vector<2x32xf32>
    %333 = arith.addf %331, %332 : vector<2x32xf32>
    %334 = arith.mulf %328, %333 : vector<2x32xf32>
    %335 = arith.addf %330, %334 : vector<2x32xf32>
    %336 = math.tanh %335 : vector<2x32xf32>
    %337 = arith.subf %316, %336 : vector<2x32xf32>
    %338 = arith.mulf %329, %337 : vector<2x32xf32>
    %339 = arith.addf %336, %338 : vector<2x32xf32>
    %340 = vector.extract_strided_slice %222 {offsets = [0, 5, 0], sizes = [2, 1, 96], strides = [1, 1, 1]} : vector<2x8x96xf32> to vector<2x1x96xf32>
    %341 = vector.shape_cast %340 : vector<2x1x96xf32> to vector<2x96xf32>
    %cst_55 = arith.constant dense<0.000000e+00> : vector<2x96xf32>
    %342 = tpu.matmul %339, %216, %cst_55 {dimension_numbers = #tpu.dot_dimension_numbers<[1], [0], [0], [1], [0, 0, 1, 1], [], []>} : vector<2x32xf32>, vector<32x96xf32>, vector<2x96xf32> -> vector<2x96xf32>
    %343 = vector.extract_strided_slice %341 {offsets = [0, 0], sizes = [2, 64], strides = [1, 1]} : vector<2x96xf32> to vector<2x64xf32>
    %344 = vector.extract_strided_slice %342 {offsets = [0, 0], sizes = [2, 64], strides = [1, 1]} : vector<2x96xf32> to vector<2x64xf32>
    %345 = arith.addf %343, %344 : vector<2x64xf32>
    %346 = arith.negf %345 : vector<2x64xf32>
    %347 = math.exp %346 : vector<2x64xf32>
    %cst_56 = arith.constant 1.000000e+00 : f32
    %348 = vector.broadcast %cst_56 : f32 to vector<2x64xf32>
    %349 = arith.addf %348, %347 : vector<2x64xf32>
    %350 = arith.divf %348, %349 : vector<2x64xf32>
    %351 = vector.extract_strided_slice %350 {offsets = [0, 0], sizes = [2, 32], strides = [1, 1]} : vector<2x64xf32> to vector<2x32xf32>
    %352 = vector.extract_strided_slice %350 {offsets = [0, 32], sizes = [2, 32], strides = [1, 1]} : vector<2x64xf32> to vector<2x32xf32>
    %353 = vector.extract_strided_slice %341 {offsets = [0, 64], sizes = [2, 32], strides = [1, 1]} : vector<2x96xf32> to vector<2x32xf32>
    %354 = vector.extract_strided_slice %342 {offsets = [0, 64], sizes = [2, 32], strides = [1, 1]} : vector<2x96xf32> to vector<2x32xf32>
    %355 = vector.broadcast %218 : vector<1x32xf32> to vector<2x32xf32>
    %356 = arith.addf %354, %355 : vector<2x32xf32>
    %357 = arith.mulf %351, %356 : vector<2x32xf32>
    %358 = arith.addf %353, %357 : vector<2x32xf32>
    %359 = math.tanh %358 : vector<2x32xf32>
    %360 = arith.subf %339, %359 : vector<2x32xf32>
    %361 = arith.mulf %352, %360 : vector<2x32xf32>
    %362 = arith.addf %359, %361 : vector<2x32xf32>
    %363 = vector.extract_strided_slice %222 {offsets = [0, 6, 0], sizes = [2, 1, 96], strides = [1, 1, 1]} : vector<2x8x96xf32> to vector<2x1x96xf32>
    %364 = vector.shape_cast %363 : vector<2x1x96xf32> to vector<2x96xf32>
    %cst_57 = arith.constant dense<0.000000e+00> : vector<2x96xf32>
    %365 = tpu.matmul %362, %216, %cst_57 {dimension_numbers = #tpu.dot_dimension_numbers<[1], [0], [0], [1], [0, 0, 1, 1], [], []>} : vector<2x32xf32>, vector<32x96xf32>, vector<2x96xf32> -> vector<2x96xf32>
    %366 = vector.extract_strided_slice %364 {offsets = [0, 0], sizes = [2, 64], strides = [1, 1]} : vector<2x96xf32> to vector<2x64xf32>
    %367 = vector.extract_strided_slice %365 {offsets = [0, 0], sizes = [2, 64], strides = [1, 1]} : vector<2x96xf32> to vector<2x64xf32>
    %368 = arith.addf %366, %367 : vector<2x64xf32>
    %369 = arith.negf %368 : vector<2x64xf32>
    %370 = math.exp %369 : vector<2x64xf32>
    %cst_58 = arith.constant 1.000000e+00 : f32
    %371 = vector.broadcast %cst_58 : f32 to vector<2x64xf32>
    %372 = arith.addf %371, %370 : vector<2x64xf32>
    %373 = arith.divf %371, %372 : vector<2x64xf32>
    %374 = vector.extract_strided_slice %373 {offsets = [0, 0], sizes = [2, 32], strides = [1, 1]} : vector<2x64xf32> to vector<2x32xf32>
    %375 = vector.extract_strided_slice %373 {offsets = [0, 32], sizes = [2, 32], strides = [1, 1]} : vector<2x64xf32> to vector<2x32xf32>
    %376 = vector.extract_strided_slice %364 {offsets = [0, 64], sizes = [2, 32], strides = [1, 1]} : vector<2x96xf32> to vector<2x32xf32>
    %377 = vector.extract_strided_slice %365 {offsets = [0, 64], sizes = [2, 32], strides = [1, 1]} : vector<2x96xf32> to vector<2x32xf32>
    %378 = vector.broadcast %218 : vector<1x32xf32> to vector<2x32xf32>
    %379 = arith.addf %377, %378 : vector<2x32xf32>
    %380 = arith.mulf %374, %379 : vector<2x32xf32>
    %381 = arith.addf %376, %380 : vector<2x32xf32>
    %382 = math.tanh %381 : vector<2x32xf32>
    %383 = arith.subf %362, %382 : vector<2x32xf32>
    %384 = arith.mulf %375, %383 : vector<2x32xf32>
    %385 = arith.addf %382, %384 : vector<2x32xf32>
    %386 = vector.extract_strided_slice %222 {offsets = [0, 7, 0], sizes = [2, 1, 96], strides = [1, 1, 1]} : vector<2x8x96xf32> to vector<2x1x96xf32>
    %387 = vector.shape_cast %386 : vector<2x1x96xf32> to vector<2x96xf32>
    %cst_59 = arith.constant dense<0.000000e+00> : vector<2x96xf32>
    %388 = tpu.matmul %385, %216, %cst_59 {dimension_numbers = #tpu.dot_dimension_numbers<[1], [0], [0], [1], [0, 0, 1, 1], [], []>} : vector<2x32xf32>, vector<32x96xf32>, vector<2x96xf32> -> vector<2x96xf32>
    %389 = vector.extract_strided_slice %387 {offsets = [0, 0], sizes = [2, 64], strides = [1, 1]} : vector<2x96xf32> to vector<2x64xf32>
    %390 = vector.extract_strided_slice %388 {offsets = [0, 0], sizes = [2, 64], strides = [1, 1]} : vector<2x96xf32> to vector<2x64xf32>
    %391 = arith.addf %389, %390 : vector<2x64xf32>
    %392 = arith.negf %391 : vector<2x64xf32>
    %393 = math.exp %392 : vector<2x64xf32>
    %cst_60 = arith.constant 1.000000e+00 : f32
    %394 = vector.broadcast %cst_60 : f32 to vector<2x64xf32>
    %395 = arith.addf %394, %393 : vector<2x64xf32>
    %396 = arith.divf %394, %395 : vector<2x64xf32>
    %397 = vector.extract_strided_slice %396 {offsets = [0, 0], sizes = [2, 32], strides = [1, 1]} : vector<2x64xf32> to vector<2x32xf32>
    %398 = vector.extract_strided_slice %396 {offsets = [0, 32], sizes = [2, 32], strides = [1, 1]} : vector<2x64xf32> to vector<2x32xf32>
    %399 = vector.extract_strided_slice %387 {offsets = [0, 64], sizes = [2, 32], strides = [1, 1]} : vector<2x96xf32> to vector<2x32xf32>
    %400 = vector.extract_strided_slice %388 {offsets = [0, 64], sizes = [2, 32], strides = [1, 1]} : vector<2x96xf32> to vector<2x32xf32>
    %401 = vector.broadcast %218 : vector<1x32xf32> to vector<2x32xf32>
    %402 = arith.addf %400, %401 : vector<2x32xf32>
    %403 = arith.mulf %397, %402 : vector<2x32xf32>
    %404 = arith.addf %399, %403 : vector<2x32xf32>
    %405 = math.tanh %404 : vector<2x32xf32>
    %406 = arith.subf %385, %405 : vector<2x32xf32>
    %407 = arith.mulf %398, %406 : vector<2x32xf32>
    %408 = arith.addf %405, %407 : vector<2x32xf32>
    %c1_61 = arith.constant 1 : index
    %c0_62 = arith.constant 0 : index
    %c0_63 = arith.constant 0 : index
    %409 = vector.load %arg14[%c1_61, %c0_62, %c0_63] : memref<2x2x32xf32, #tpu.memory_space<vmem>>, vector<1x2x32xf32>
    %410 = vector.shape_cast %409 : vector<1x2x32xf32> to vector<2x32xf32>
    %411 = vector.shape_cast %408 : vector<2x32xf32> to vector<1x2x32xf32>
    tpu.vector_store %arg14[%c1_61, %c0_62, %c0_63], %411 {strides = array<i32>} : memref<2x2x32xf32, #tpu.memory_space<vmem>>, vector<1x2x32xf32>,
    %412 = vector.shape_cast %247 : vector<2x32xf32> to vector<2x1x32xf32>
    %413 = vector.shape_cast %270 : vector<2x32xf32> to vector<2x1x32xf32>
    %414 = vector.shape_cast %293 : vector<2x32xf32> to vector<2x1x32xf32>
    %415 = vector.shape_cast %316 : vector<2x32xf32> to vector<2x1x32xf32>
    %416 = vector.shape_cast %339 : vector<2x32xf32> to vector<2x1x32xf32>
    %417 = vector.shape_cast %362 : vector<2x32xf32> to vector<2x1x32xf32>
    %418 = vector.shape_cast %385 : vector<2x32xf32> to vector<2x1x32xf32>
    %419 = vector.shape_cast %408 : vector<2x32xf32> to vector<2x1x32xf32>
    %420 = tpu.concatenate %412, %413, %414, %415, %416, %417, %418, %419 in 1 : vector<2x1x32xf32>, vector<2x1x32xf32>, vector<2x1x32xf32>, vector<2x1x32xf32>, vector<2x1x32xf32>, vector<2x1x32xf32>, vector<2x1x32xf32>, vector<2x1x32xf32> -> vector<2x8x32xf32>
    %421 = vector.shape_cast %420 : vector<2x8x32xf32> to vector<16x32xf32>
    %c0_64 = arith.constant 0 : index
    %c0_65 = arith.constant 0 : index
    %422 = vector.load %arg11[%c0_64, %c0_65] : memref<32x16xf32, #tpu.memory_space<vmem>>, vector<32x16xf32>
    %cst_66 = arith.constant dense<0.000000e+00> : vector<16x16xf32>
    %423 = tpu.matmul %421, %422, %cst_66 {dimension_numbers = #tpu.dot_dimension_numbers<[1], [0], [0], [1], [0, 0, 1, 1], [], []>} : vector<16x32xf32>, vector<32x16xf32>, vector<16x16xf32> -> vector<16x16xf32>
    %c0_67 = arith.constant 0 : index
    %c0_68 = arith.constant 0 : index
    %424 = vector.load %arg12[%c0_67, %c0_68] : memref<1x16xf32, #tpu.memory_space<vmem>>, vector<1x16xf32>
    %425 = vector.broadcast %424 : vector<1x16xf32> to vector<16x16xf32>
    %426 = arith.addf %423, %425 : vector<16x16xf32>
    %c0_69 = arith.constant 0 : index
    %c0_70 = arith.constant 0 : index
    %427 = vector.load %arg13[%c0_69, %c0_70] : memref<16x16xf32, #tpu.memory_space<vmem>>, vector<16x16xf32>
    tpu.vector_store %arg13[%c0_69, %c0_70], %426 {strides = array<i32>} : memref<16x16xf32, #tpu.memory_space<vmem>>, vector<16x16xf32>,
    return
  }
}

</mosaic_0001>

<llo_original>
// kernel: decoder_forward.1
$region0: #{decoder_forward.1}
  #allocation0 [shape = 'u32[]', space=smem, size = 0x4, offset = 0x4, fixed_abs, tag = 'smem constant byte address 0x4 - core index']
  #allocation1 [shape = 'u32[72,128]{1,0:T(1,128)}', space=vmem, size = 0x9000, scoped, tag = 'internal scratch']
  %s0 = inlined_call_operand.vmem [shape: s32[16,1], index: 0, kind: input, shape index: {}]
  %s1 = inlined_call_operand.vmem [shape: f32[16,32], index: 1, kind: input, shape index: {}]
  %s2 = inlined_call_operand.vmem [shape: f32[2,2,32], index: 2, kind: input, shape index: {}]
  %s3 = inlined_call_operand.vmem [shape: f32[32,96], index: 3, kind: input, shape index: {}]
  %s4 = inlined_call_operand.hbm [shape: f32[32,96], index: 4, kind: input, shape index: {}]
  %s5 = inlined_call_operand.vmem [shape: f32[1,96], index: 5, kind: input, shape index: {}]
  %s6 = inlined_call_operand.vmem [shape: f32[1,32], index: 6, kind: input, shape index: {}]
  %s7 = inlined_call_operand.hbm [shape: f32[32,96], index: 7, kind: input, shape index: {}]
  %s8 = inlined_call_operand.hbm [shape: f32[32,96], index: 8, kind: input, shape index: {}]
  %s9 = inlined_call_operand.vmem [shape: f32[1,96], index: 9, kind: input, shape index: {}]
  %s10 = inlined_call_operand.vmem [shape: f32[1,32], index: 10, kind: input, shape index: {}]
  %s11 = inlined_call_operand.vmem [shape: f32[32,16], index: 11, kind: input, shape index: {}]
  %s12 = inlined_call_operand.vmem [shape: f32[1,16], index: 12, kind: input, shape index: {}]
  %s13 = inlined_call_operand.hbm [shape: f32[16,16], index: 13, kind: output, shape index: {0}]
  %s14 = inlined_call_operand.hbm [shape: f32[2,2,32], index: 14, kind: output, shape index: {1}]
  %15 = xla_tuple %s13, %s14
  %s16 = sld [smem:[#allocation0]]
  $region82: #{decoder_forward.1} parent=0
    _
  %s18 = ssub.s32 1, %s16
  %s19 = scalar_select 0, %s18, %s16
  $region1: #{decoder_forward.1} parent=0
    #allocation2 [shape = 'u8[16384]{0}', space=vmem, size = 0x4000, scoped, tag = 'input window, operand 4, single buffered']
    #allocation3 [shape = 's32[1]{0}', space=sflag, size = 0x4, scoped, tag = 'scoped memory for decoder_forward.1']
    #allocation4 [shape = 's32[1]{0}', space=sflag, size = 0x4, scoped, tag = 'scoped memory for decoder_forward.1']
    #allocation5 [shape = 'u8[16384]{0}', space=vmem, size = 0x4000, scoped, tag = 'input window, operand 7, single buffered']
    #allocation6 [shape = 's32[1]{0}', space=sflag, size = 0x4, scoped, tag = 'scoped memory for decoder_forward.1']
    #allocation7 [shape = 'u8[16384]{0}', space=vmem, size = 0x4000, scoped, tag = 'input window, operand 8, single buffered']
    #allocation8 [shape = 'u8[8192]{0}', space=vmem, size = 0x2000, scoped, tag = 'output window, operand 0, single buffered']
    #allocation9 [shape = 'u8[2048]{0}', space=vmem, size = 0x800, scoped, tag = 'output window, operand 1, single buffered']
    #allocation10 [shape = 's32[1]{0}', space=sflag, size = 0x4, scoped, tag = 'scoped memory for decoder_forward.1']
    %20 = vsyncpa [#allocation3], 0
    %21 = vsyncpa [#allocation6], 0
    %22 = vsyncpa [#allocation4], 0
    %23 = vsyncpa [#allocation10], 0
    // Predicated region
    $region2: #{decoder_forward.1} parent=1 // pred_check
      _
    $region3: #{decoder_forward.1} parent=1 // pred_check_branch
      %25 = sbr.rel (0) target = $region5
    $region4: #{decoder_forward.1} parent=1 // pred_region
      _
    $region5: #{decoder_forward.1} parent=1 // pred_fallthru
      _
    // Predicated region
    $region6: #{decoder_forward.1} parent=1 // pred_check
      _
    $region7: #{decoder_forward.1} parent=1 // pred_check_branch
      %27 = sbr.rel (0) target = $region9
    $region8: #{decoder_forward.1} parent=1 // pred_region
      _
    $region9: #{decoder_forward.1} parent=1 // pred_fallthru
      _
    // Predicated region
    $region10: #{decoder_forward.1} parent=1 // pred_check
      _
    $region11: #{decoder_forward.1} parent=1 // pred_check_branch
      %29 = sbr.rel (0) target = $region13
    $region12: #{decoder_forward.1} parent=1 // pred_region
      _
    $region13: #{decoder_forward.1} parent=1 // pred_fallthru
      _
    // Predicated region
    $region14: #{decoder_forward.1} parent=1 // pred_check
      _
    $region15: #{decoder_forward.1} parent=1 // pred_check_branch
      %31 = sbr.rel (0) target = $region17
    $region16: #{decoder_forward.1} parent=1 // pred_region
      _
    $region17: #{decoder_forward.1} parent=1 // pred_fallthru
      _
    // Predicated region
    $region18: #{decoder_forward.1} parent=1 // pred_check
      _
    $region19: #{decoder_forward.1} parent=1 // pred_check_branch
      %33 = sbr.rel (0) target = $region21
    $region20: #{decoder_forward.1} parent=1 // pred_region
      %35 = vsyncadd [#allocation3], 0
      %s36 = sshll.u32 %s4, 4
      %s37 = int_to_ptr.hbm [resolvable:$true] %s36
      %s38 = sshll.u32 [#allocation2], 4
      %s39 = int_to_ptr.vmem [resolvable:$true] %s38
      %44 = dma.hbm_to_vmem [thread:$0]  %s37, 512, %s39, [#allocation3], 128, 128, 8
    $region21: #{decoder_forward.1} parent=1 // pred_fallthru
      _
    // Predicated region
    $region22: #{decoder_forward.1} parent=1 // pred_check
      _
    $region23: #{decoder_forward.1} parent=1 // pred_check_branch
      %46 = sbr.rel (0) target = $region25
    $region24: #{decoder_forward.1} parent=1 // pred_region
      _
    $region25: #{decoder_forward.1} parent=1 // pred_fallthru
      _
    // Predicated region
    $region26: #{decoder_forward.1} parent=1 // pred_check
      _
    $region27: #{decoder_forward.1} parent=1 // pred_check_branch
      %48 = sbr.rel (0) target = $region29
    $region28: #{decoder_forward.1} parent=1 // pred_region
      _
    $region29: #{decoder_forward.1} parent=1 // pred_fallthru
      _
    // Predicated region
    $region30: #{decoder_forward.1} parent=1 // pred_check
      _
    $region31: #{decoder_forward.1} parent=1 // pred_check_branch
      %50 = sbr.rel (0) target = $region33
    $region32: #{decoder_forward.1} parent=1 // pred_region
      %52 = vsyncadd [#allocation6], 0
      %s53 = sshll.u32 %s7, 4
      %s54 = int_to_ptr.hbm [resolvable:$true] %s53
      %s55 = sshll.u32 [#allocation5], 4
      %s56 = int_to_ptr.vmem [resolvable:$true] %s55
      %61 = dma.hbm_to_vmem [thread:$0]  %s54, 512, %s56, [#allocation6], 128, 128, 8
    $region33: #{decoder_forward.1} parent=1 // pred_fallthru
      _
    // Predicated region
    $region34: #{decoder_forward.1} parent=1 // pred_check
      _
    $region35: #{decoder_forward.1} parent=1 // pred_check_branch
      %63 = sbr.rel (0) target = $region37
    $region36: #{decoder_forward.1} parent=1 // pred_region
      %65 = vsyncadd [#allocation6], 0
      %s66 = sshll.u32 %s8, 4
      %s67 = int_to_ptr.hbm [resolvable:$true] %s66
      %s68 = sshll.u32 [#allocation7], 4
      %s69 = int_to_ptr.vmem [resolvable:$true] %s68
      %74 = dma.hbm_to_vmem [thread:$0]  %s67, 512, %s69, [#allocation6], 128, 128, 8
    $region37: #{decoder_forward.1} parent=1 // pred_fallthru
      _
    // Predicated region
    $region38: #{decoder_forward.1} parent=1 // pred_check
      _
    $region39: #{decoder_forward.1} parent=1 // pred_check_branch
      %76 = sbr.rel (0) target = $region41
    $region40: #{decoder_forward.1} parent=1 // pred_region
      _
    $region41: #{decoder_forward.1} parent=1 // pred_fallthru
      _
    // Predicated region
    $region42: #{decoder_forward.1} parent=1 // pred_check
      _
    $region43: #{decoder_forward.1} parent=1 // pred_check_branch
      %78 = sbr.rel (0) target = $region45
    $region44: #{decoder_forward.1} parent=1 // pred_region
      _
    $region45: #{decoder_forward.1} parent=1 // pred_fallthru
      _
    // Predicated region
    $region46: #{decoder_forward.1} parent=1 // pred_check
      _
    $region47: #{decoder_forward.1} parent=1 // pred_check_branch
      %80 = sbr.rel (0) target = $region49
    $region48: #{decoder_forward.1} parent=1 // pred_region
      _
    $region49: #{decoder_forward.1} parent=1 // pred_fallthru
      _
    // Predicated region
    $region50: #{decoder_forward.1} parent=1 // pred_check
      _
    $region51: #{decoder_forward.1} parent=1 // pred_check_branch
      %82 = sbr.rel (0) target = $region53
    $region52: #{decoder_forward.1} parent=1 // pred_region
      _
    $region53: #{decoder_forward.1} parent=1 // pred_fallthru
      _
    // Predicated region
    $region54: #{decoder_forward.1} parent=1 // pred_check
      _
    $region55: #{decoder_forward.1} parent=1 // pred_check_branch
      %84 = sbr.rel (0) target = $region57
    $region56: #{decoder_forward.1} parent=1 // pred_region
      %86 = dma.done [#allocation3], 512
    $region57: #{decoder_forward.1} parent=1 // pred_fallthru
      _
    // Predicated region
    $region58: #{decoder_forward.1} parent=1 // pred_check
      _
    $region59: #{decoder_forward.1} parent=1 // pred_check_branch
      %88 = sbr.rel (0) target = $region61
    $region60: #{decoder_forward.1} parent=1 // pred_region
      %90 = dma.done [#allocation6], 512
    $region61: #{decoder_forward.1} parent=1 // pred_fallthru
      _
    // Predicated region
    $region62: #{decoder_forward.1} parent=1 // pred_check
      _
    $region63: #{decoder_forward.1} parent=1 // pred_check_branch
      %92 = sbr.rel (0) target = $region65
    $region64: #{decoder_forward.1} parent=1 // pred_region
      %94 = dma.done [#allocation6], 512
    $region65: #{decoder_forward.1} parent=1 // pred_fallthru
      _
    %v95 = vld [vmem:[%s0] sm:$0xff]
    %v96 = vld [vmem:[%s0 + $0x8] sm:$0xff]
    %v97 = vlaneseq
    %v98 = vand.u32 %v97, 127
    %99 = vset.pattern.permute.xlu0 0
    %100 = vperm.xlu0 %99, %v95
    %v101 = vpop.permute.xlu0 %100
    %102 = vset.pattern.permute.xlu0 0
    %103 = vperm.xlu0 %102, %v96
    %v104 = vpop.permute.xlu0 %103
    %vm105 = vcmp.eq.s32.totalorder %v101, %v98
    %vm106 = vcmp.eq.s32.totalorder %v104, %v98
    %v107 = vsel %vm105, 1, 0
    %v108 = vsel %vm106, 1, 0
    %v109 = vcvt.s32.f32 %v107
    %v110 = vcvt.s32.f32 %v108
    %v111 = vld [vmem:[%s1] sm:$0xff]
    %v112 = vld [vmem:[%s1 + $0x8] sm:$0xff]
    %vm113 = vcmask 130048
    %v115 = vsel %vm113, %v109, 0
    %v118 = vsel %vm113, %v110, 0
    %120 = vmatpush.msra.mxu0 0.0
    %121 = vmatpush.msra.mxu0 0.0
    %122 = vmatpush.msra.mxu0 0.0
    %123 = vmatpush.msra.mxu0 0.0
    %124 = vmatpush.msra.mxu0 0.0
    %125 = vmatpush.msra.mxu0 0.0
    %126 = vmatpush.msra.mxu0 0.0
    %127 = vmatpush.msra.mxu0 0.0
    %128 = vmatpush.msra.mxu0 0.0
    %129 = vmatpush.msra.mxu0 0.0
    %130 = vmatpush.msra.mxu0 0.0
    %131 = vmatpush.msra.mxu0 0.0
    %132 = vmatpush.msra.mxu0 0.0
    %133 = vmatpush.msra.mxu0 0.0
    %134 = vmatpush.msra.mxu0 %v112
    %135 = vmatpush.msra.mxu0 %v111
    %136 = vmatmul.f32.gmra.mxu0 %v115
    %v137 = vpop.f32.mrf.mxu0
    %v138 = vadd.f32 0.0, %v137
    %139 = vmatmul.f32.gmra.mxu0 %v118
    %v140 = vpop.f32.mrf.mxu0
    %v141 = vadd.f32 0.0, %v140
    %142 = vdwg.mxu0
    %v143 = vld [vmem:[%s3] sm:$0xff]
    %v144 = vld [vmem:[%s3 + $0x8] sm:$0xff]
    %v145 = vld [vmem:[%s3 + $0x10] sm:$0xff]
    %v146 = vld [vmem:[%s3 + $0x18] sm:$0xff]
    %v147 = vld [vmem:[#allocation2] sm:$0xff]
    %v148 = vld [vmem:[#allocation2 + $0x8] sm:$0xff]
    %v149 = vld [vmem:[#allocation2 + $0x10] sm:$0xff]
    %v150 = vld [vmem:[#allocation2 + $0x18] sm:$0xff]
    %v151 = vld [vmem:[%s5] sm:$0x1]
    %v152 = vld [vmem:[%s6] sm:$0x1]
    %v154 = vperm.slane %v151, 0
    %vm156 = vcmask 261120
    %v158 = vsel %vm156, %v138, 0
    %v161 = vsel %vm156, %v141, 0
    %163 = vmatpush.msra.mxu0 0.0
    %164 = vmatpush.msra.mxu0 0.0
    %165 = vmatpush.msra.mxu0 0.0
    %166 = vmatpush.msra.mxu0 0.0
    %167 = vmatpush.msra.mxu0 0.0
    %168 = vmatpush.msra.mxu0 0.0
    %169 = vmatpush.msra.mxu0 0.0
    %170 = vmatpush.msra.mxu0 0.0
    %171 = vmatpush.msra.mxu0 0.0
    %172 = vmatpush.msra.mxu0 0.0
    %173 = vmatpush.msra.mxu0 0.0
    %174 = vmatpush.msra.mxu0 0.0
    %175 = vmatpush.msra.mxu0 %v146
    %176 = vmatpush.msra.mxu0 %v145
    %177 = vmatpush.msra.mxu0 %v144
    %178 = vmatpush.msra.mxu0 %v143
    %179 = vmatmul.f32.gmra.mxu0 %v158
    %v180 = vpop.f32.mrf.mxu0
    %v181 = vadd.f32 %v154, %v180
    %182 = vmatmul.f32.gmra.mxu0 %v161
    %v183 = vpop.f32.mrf.mxu0
    %v184 = vadd.f32 %v154, %v183
    %185 = vdwg.mxu0
    %v186 = vld [vmem:[%s2] sm:$0x3]
    %v188 = vsel %vm156, %v186, 0
    %190 = vmatpush.msra.mxu0 0.0
    %191 = vmatpush.msra.mxu0 0.0
    %192 = vmatpush.msra.mxu0 0.0
    %193 = vmatpush.msra.mxu0 0.0
    %194 = vmatpush.msra.mxu0 0.0
    %195 = vmatpush.msra.mxu0 0.0
    %196 = vmatpush.msra.mxu0 0.0
    %197 = vmatpush.msra.mxu0 0.0
    %198 = vmatpush.msra.mxu0 0.0
    %199 = vmatpush.msra.mxu0 0.0
    %200 = vmatpush.msra.mxu0 0.0
    %201 = vmatpush.msra.mxu0 0.0
    %202 = vmatpush.msra.mxu0 %v150
    %203 = vmatpush.msra.mxu0 %v149
    %204 = vmatpush.msra.mxu0 %v148
    %205 = vmatpush.msra.mxu0 %v147
    %206 = vmatmul.f32.gmra.mxu0 %v188
    %v207 = vpop.f32.mrf.mxu0
    %v208 = vadd.f32 0.0, %v207
    %209 = vdwg.mxu0
    %v211 = vrot.slane %v208, 1
    %v214 = vadd.f32 %v181, %v208
    %v215 = vadd.f32 %v184, %v211
    %v216 = vxor.u32 %v214, 2147483648
    %v217 = vxor.u32 %v215, 2147483648
    %v218 = vmul.f32 %v216, 1.442695
    %v219 = vpow.pop %v218
    %v220 = vmul.f32 %v217, 1.442695
    %v221 = vpow.pop %v220
    %v222 = vadd.f32 %v219, 1.0
    %v223 = vadd.f32 %v221, 1.0
    %v224 = vrcp.pop %v222
    %v225 = vmul.f32 %v222, %v224
    %v226 = vsub.f32 1.0, %v225
    %v227 = vmul.f32 %v224, %v226
    %v228 = vadd.f32 %v224, %v227
    %vm229 = vweird.f32 %v222
    %vm230 = vweird.f32 %v224
    %vm231 = vmor %vm229, %vm230
    %v232 = vsel %vm231, %v224, %v228
    %v233 = vand.u32 2147483647, %v222
    %vm234 = vcmp.eq.f32.partialorder %v233, 8.507059e+37
    %v235 = vand.u32 %v222, 2147483648
    %v236 = vor.u32 1.1754944e-38, %v235
    %v237 = vsel %vm234, %v236, %v232
    %v238 = vmul.f32 1.0, %v237
    %v239 = vrcp.pop %v223
    %v240 = vmul.f32 %v223, %v239
    %v241 = vsub.f32 1.0, %v240
    %v242 = vmul.f32 %v239, %v241
    %v243 = vadd.f32 %v239, %v242
    %vm244 = vweird.f32 %v223
    %vm245 = vweird.f32 %v239
    %vm246 = vmor %vm244, %vm245
    %v247 = vsel %vm246, %v239, %v243
    %v248 = vand.u32 2147483647, %v223
    %vm249 = vcmp.eq.f32.partialorder %v248, 8.507059e+37
    %v250 = vand.u32 %v223, 2147483648
    %v251 = vor.u32 1.1754944e-38, %v250
    %v252 = vsel %vm249, %v251, %v247
    %v253 = vmul.f32 1.0, %v252
    %v255 = vperm.slane %v152, 0
    %256 = vrot.lane.b32.xlu0 %v255, 64
    %v257 = vpop.permute.xlu0 %256
    %v259 = vadd.f32 %v208, %v257
    %v261 = vrot.slane %v259, 1
    %262 = vrot.lane.b32.xlu0 %v259, 64
    %v263 = vpop.permute.xlu0 %262
    %264 = vrot.lane.b32.xlu0 %v261, 64
    %v265 = vpop.permute.xlu0 %264
    %v268 = vmul.f32 %v238, %v263
    %v269 = vmul.f32 %v253, %v265
    %272 = vrot.lane.b32.xlu0 %v268, 64
    %v273 = vpop.permute.xlu0 %272
    %274 = vrot.lane.b32.xlu0 %v269, 64
    %v275 = vpop.permute.xlu0 %274
    %v278 = vadd.f32 %v181, %v273
    %v279 = vadd.f32 %v184, %v275
    %v280 = vtanh.pop %v278
    %v281 = vtanh.pop %v279
    %v284 = vrot.slane %v281, 7
    %vm285 = vcmask 1041409
    %v286 = vsel %vm285, %v284, %v280
    %287 = vrot.lane.b32.xlu0 %v286, 64
    %v288 = vpop.permute.xlu0 %287
    %v290 = vsub.f32 %v186, %v288
    %v292 = vrot.slane %v290, 1
    %293 = vrot.lane.b32.xlu0 %v290, 32
    %v294 = vpop.permute.xlu0 %293
    %295 = vrot.lane.b32.xlu0 %v292, 32
    %v296 = vpop.permute.xlu0 %295
    %v299 = vmul.f32 %v238, %v294
    %v300 = vmul.f32 %v253, %v296
    %303 = vrot.lane.b32.xlu0 %v299, 32
    %v304 = vpop.permute.xlu0 %303
    %305 = vrot.lane.b32.xlu0 %v300, 32
    %v306 = vpop.permute.xlu0 %305
    %v309 = vadd.f32 %v280, %v304
    %v310 = vadd.f32 %v281, %v306
    %v313 = vrot.slane %v310, 7
    %v314 = vsel %vm285, %v313, %v309
    %315 = vrot.lane.b32.xlu0 %v314, 64
    %v316 = vpop.permute.xlu0 %315
    %v317 = vsel %vm156, %v316, 0
    %319 = vmatpush.msra.mxu0 0.0
    %320 = vmatpush.msra.mxu0 0.0
    %321 = vmatpush.msra.mxu0 0.0
    %322 = vmatpush.msra.mxu0 0.0
    %323 = vmatpush.msra.mxu0 0.0
    %324 = vmatpush.msra.mxu0 0.0
    %325 = vmatpush.msra.mxu0 0.0
    %326 = vmatpush.msra.mxu0 0.0
    %327 = vmatpush.msra.mxu0 0.0
    %328 = vmatpush.msra.mxu0 0.0
    %329 = vmatpush.msra.mxu0 0.0
    %330 = vmatpush.msra.mxu0 0.0
    %331 = vmatpush.msra.mxu0 %v150
    %332 = vmatpush.msra.mxu0 %v149
    %333 = vmatpush.msra.mxu0 %v148
    %334 = vmatpush.msra.mxu0 %v147
    %335 = vmatmul.f32.gmra.mxu0 %v317
    %v336 = vpop.f32.mrf.mxu0
    %v337 = vadd.f32 0.0, %v336
    %338 = vdwg.mxu0
    %v340 = vrot.slane %v337, 7
    %v343 = vadd.f32 %v181, %v340
    %v344 = vadd.f32 %v184, %v337
    %v345 = vxor.u32 %v343, 2147483648
    %v346 = vxor.u32 %v344, 2147483648
    %v347 = vmul.f32 %v345, 1.442695
    %v348 = vpow.pop %v347
    %v349 = vmul.f32 %v346, 1.442695
    %v350 = vpow.pop %v349
    %v351 = vadd.f32 %v348, 1.0
    %v352 = vadd.f32 %v350, 1.0
    %v353 = vrcp.pop %v351
    %v354 = vmul.f32 %v351, %v353
    %v355 = vsub.f32 1.0, %v354
    %v356 = vmul.f32 %v353, %v355
    %v357 = vadd.f32 %v353, %v356
    %vm358 = vweird.f32 %v351
    %vm359 = vweird.f32 %v353
    %vm360 = vmor %vm358, %vm359
    %v361 = vsel %vm360, %v353, %v357
    %v362 = vand.u32 2147483647, %v351
    %vm363 = vcmp.eq.f32.partialorder %v362, 8.507059e+37
    %v364 = vand.u32 %v351, 2147483648
    %v365 = vor.u32 1.1754944e-38, %v364
    %v366 = vsel %vm363, %v365, %v361
    %v367 = vmul.f32 1.0, %v366
    %v368 = vrcp.pop %v352
    %v369 = vmul.f32 %v352, %v368
    %v370 = vsub.f32 1.0, %v369
    %v371 = vmul.f32 %v368, %v370
    %v372 = vadd.f32 %v368, %v371
    %vm373 = vweird.f32 %v352
    %vm374 = vweird.f32 %v368
    %vm375 = vmor %vm373, %vm374
    %v376 = vsel %vm375, %v368, %v372
    %v377 = vand.u32 2147483647, %v352
    %vm378 = vcmp.eq.f32.partialorder %v377, 8.507059e+37
    %v379 = vand.u32 %v352, 2147483648
    %v380 = vor.u32 1.1754944e-38, %v379
    %v381 = vsel %vm378, %v380, %v376
    %v382 = vmul.f32 1.0, %v381
    %v383 = vadd.f32 %v337, %v257
    %v385 = vrot.slane %v383, 7
    %386 = vrot.lane.b32.xlu0 %v385, 64
    %v387 = vpop.permute.xlu0 %386
    %388 = vrot.lane.b32.xlu0 %v383, 64
    %v389 = vpop.permute.xlu0 %388
    %v392 = vmul.f32 %v367, %v387
    %v393 = vmul.f32 %v382, %v389
    %396 = vrot.lane.b32.xlu0 %v392, 64
    %v397 = vpop.permute.xlu0 %396
    %398 = vrot.lane.b32.xlu0 %v393, 64
    %v399 = vpop.permute.xlu0 %398
    %v402 = vadd.f32 %v181, %v397
    %v403 = vadd.f32 %v184, %v399
    %v404 = vtanh.pop %v402
    %v405 = vtanh.pop %v403
    %v408 = vrot.slane %v404, 1
    %v409 = vrot.slane %v405, 1
    %v412 = vsub.f32 %v309, %v408
    %v413 = vsub.f32 %v310, %v409
    %v416 = vrot.slane %v412, 7
    %v417 = vrot.slane %v413, 7
    %418 = vrot.lane.b32.xlu0 %v416, 96
    %v419 = vpop.permute.xlu0 %418
    %420 = vrot.lane.b32.xlu0 %v417, 96
    %v421 = vpop.permute.xlu0 %420
    %v424 = vmul.f32 %v367, %v419
    %v425 = vmul.f32 %v382, %v421
    %428 = vrot.lane.b32.xlu0 %v424, 32
    %v429 = vpop.permute.xlu0 %428
    %430 = vrot.lane.b32.xlu0 %v425, 32
    %v431 = vpop.permute.xlu0 %430
    %v434 = vadd.f32 %v404, %v429
    %v435 = vadd.f32 %v405, %v431
    %v438 = vrot.slane %v434, 1
    %v439 = vsel %vm285, %v435, %v438
    %440 = vrot.lane.b32.xlu0 %v439, 64
    %v441 = vpop.permute.xlu0 %440
    %v442 = vsel %vm156, %v441, 0
    %444 = vmatpush.msra.mxu0 0.0
    %445 = vmatpush.msra.mxu0 0.0
    %446 = vmatpush.msra.mxu0 0.0
    %447 = vmatpush.msra.mxu0 0.0
    %448 = vmatpush.msra.mxu0 0.0
    %449 = vmatpush.msra.mxu0 0.0
    %450 = vmatpush.msra.mxu0 0.0
    %451 = vmatpush.msra.mxu0 0.0
    %452 = vmatpush.msra.mxu0 0.0
    %453 = vmatpush.msra.mxu0 0.0
    %454 = vmatpush.msra.mxu0 0.0
    %455 = vmatpush.msra.mxu0 0.0
    %456 = vmatpush.msra.mxu0 %v150
    %457 = vmatpush.msra.mxu0 %v149
    %458 = vmatpush.msra.mxu0 %v148
    %459 = vmatpush.msra.mxu0 %v147
    %460 = vmatmul.f32.gmra.mxu0 %v442
    %v461 = vpop.f32.mrf.mxu0
    %v462 = vadd.f32 0.0, %v461
    %463 = vdwg.mxu0
    %v465 = vrot.slane %v462, 6
    %v466 = vrot.slane %v462, 7
    %v469 = vadd.f32 %v181, %v465
    %v470 = vadd.f32 %v184, %v466
    %v471 = vxor.u32 %v469, 2147483648
    %v472 = vxor.u32 %v470, 2147483648
    %v473 = vmul.f32 %v471, 1.442695
    %v474 = vpow.pop %v473
    %v475 = vmul.f32 %v472, 1.442695
    %v476 = vpow.pop %v475
    %v477 = vadd.f32 %v474, 1.0
    %v478 = vadd.f32 %v476, 1.0
    %v479 = vrcp.pop %v477
    %v480 = vmul.f32 %v477, %v479
    %v481 = vsub.f32 1.0, %v480
    %v482 = vmul.f32 %v479, %v481
    %v483 = vadd.f32 %v479, %v482
    %vm484 = vweird.f32 %v477
    %vm485 = vweird.f32 %v479
    %vm486 = vmor %vm484, %vm485
    %v487 = vsel %vm486, %v479, %v483
    %v488 = vand.u32 2147483647, %v477
    %vm489 = vcmp.eq.f32.partialorder %v488, 8.507059e+37
    %v490 = vand.u32 %v477, 2147483648
    %v491 = vor.u32 1.1754944e-38, %v490
    %v492 = vsel %vm489, %v491, %v487
    %v493 = vmul.f32 1.0, %v492
    %v494 = vrcp.pop %v478
    %v495 = vmul.f32 %v478, %v494
    %v496 = vsub.f32 1.0, %v495
    %v497 = vmul.f32 %v494, %v496
    %v498 = vadd.f32 %v494, %v497
    %vm499 = vweird.f32 %v478
    %vm500 = vweird.f32 %v494
    %vm501 = vmor %vm499, %vm500
    %v502 = vsel %vm501, %v494, %v498
    %v503 = vand.u32 2147483647, %v478
    %vm504 = vcmp.eq.f32.partialorder %v503, 8.507059e+37
    %v505 = vand.u32 %v478, 2147483648
    %v506 = vor.u32 1.1754944e-38, %v505
    %v507 = vsel %vm504, %v506, %v502
    %v508 = vmul.f32 1.0, %v507
    %v509 = vadd.f32 %v462, %v257
    %v511 = vrot.slane %v509, 6
    %v512 = vrot.slane %v509, 7
    %513 = vrot.lane.b32.xlu0 %v511, 64
    %v514 = vpop.permute.xlu0 %513
    %515 = vrot.lane.b32.xlu0 %v512, 64
    %v516 = vpop.permute.xlu0 %515
    %v519 = vmul.f32 %v493, %v514
    %v520 = vmul.f32 %v508, %v516
    %523 = vrot.lane.b32.xlu0 %v519, 64
    %v524 = vpop.permute.xlu0 %523
    %525 = vrot.lane.b32.xlu0 %v520, 64
    %v526 = vpop.permute.xlu0 %525
    %v529 = vadd.f32 %v181, %v524
    %v530 = vadd.f32 %v184, %v526
    %v531 = vtanh.pop %v529
    %v532 = vtanh.pop %v530
    %v535 = vrot.slane %v531, 1
    %v536 = vrot.slane %v532, 1
    %v539 = vsub.f32 %v434, %v535
    %v540 = vsub.f32 %v435, %v536
    %v543 = vrot.slane %v539, 7
    %v544 = vrot.slane %v540, 7
    %545 = vrot.lane.b32.xlu0 %v543, 96
    %v546 = vpop.permute.xlu0 %545
    %547 = vrot.lane.b32.xlu0 %v544, 96
    %v548 = vpop.permute.xlu0 %547
    %v551 = vmul.f32 %v493, %v546
    %v552 = vmul.f32 %v508, %v548
    %555 = vrot.lane.b32.xlu0 %v551, 32
    %v556 = vpop.permute.xlu0 %555
    %557 = vrot.lane.b32.xlu0 %v552, 32
    %v558 = vpop.permute.xlu0 %557
    %v561 = vadd.f32 %v531, %v556
    %v562 = vadd.f32 %v532, %v558
    %v565 = vrot.slane %v561, 2
    %v566 = vrot.slane %v562, 1
    %v567 = vsel %vm285, %v566, %v565
    %568 = vrot.lane.b32.xlu0 %v567, 64
    %v569 = vpop.permute.xlu0 %568
    %v570 = vsel %vm156, %v569, 0
    %572 = vmatpush.msra.mxu0 0.0
    %573 = vmatpush.msra.mxu0 0.0
    %574 = vmatpush.msra.mxu0 0.0
    %575 = vmatpush.msra.mxu0 0.0
    %576 = vmatpush.msra.mxu0 0.0
    %577 = vmatpush.msra.mxu0 0.0
    %578 = vmatpush.msra.mxu0 0.0
    %579 = vmatpush.msra.mxu0 0.0
    %580 = vmatpush.msra.mxu0 0.0
    %581 = vmatpush.msra.mxu0 0.0
    %582 = vmatpush.msra.mxu0 0.0
    %583 = vmatpush.msra.mxu0 0.0
    %584 = vmatpush.msra.mxu0 %v150
    %585 = vmatpush.msra.mxu0 %v149
    %586 = vmatpush.msra.mxu0 %v148
    %587 = vmatpush.msra.mxu0 %v147
    %588 = vmatmul.f32.gmra.mxu0 %v570
    %v589 = vpop.f32.mrf.mxu0
    %v590 = vadd.f32 0.0, %v589
    %591 = vdwg.mxu0
    %v593 = vrot.slane %v590, 5
    %v594 = vrot.slane %v590, 6
    %v597 = vadd.f32 %v181, %v593
    %v598 = vadd.f32 %v184, %v594
    %v599 = vxor.u32 %v597, 2147483648
    %v600 = vxor.u32 %v598, 2147483648
    %v601 = vmul.f32 %v599, 1.442695
    %v602 = vpow.pop %v601
    %v603 = vmul.f32 %v600, 1.442695
    %v604 = vpow.pop %v603
    %v605 = vadd.f32 %v602, 1.0
    %v606 = vadd.f32 %v604, 1.0
    %v607 = vrcp.pop %v605
    %v608 = vmul.f32 %v605, %v607
    %v609 = vsub.f32 1.0, %v608
    %v610 = vmul.f32 %v607, %v609
    %v611 = vadd.f32 %v607, %v610
    %vm612 = vweird.f32 %v605
    %vm613 = vweird.f32 %v607
    %vm614 = vmor %vm612, %vm613
    %v615 = vsel %vm614, %v607, %v611
    %v616 = vand.u32 2147483647, %v605
    %vm617 = vcmp.eq.f32.partialorder %v616, 8.507059e+37
    %v618 = vand.u32 %v605, 2147483648
    %v619 = vor.u32 1.1754944e-38, %v618
    %v620 = vsel %vm617, %v619, %v615
    %v621 = vmul.f32 1.0, %v620
    %v622 = vrcp.pop %v606
    %v623 = vmul.f32 %v606, %v622
    %v624 = vsub.f32 1.0, %v623
    %v625 = vmul.f32 %v622, %v624
    %v626 = vadd.f32 %v622, %v625
    %vm627 = vweird.f32 %v606
    %vm628 = vweird.f32 %v622
    %vm629 = vmor %vm627, %vm628
    %v630 = vsel %vm629, %v622, %v626
    %v631 = vand.u32 2147483647, %v606
    %vm632 = vcmp.eq.f32.partialorder %v631, 8.507059e+37
    %v633 = vand.u32 %v606, 2147483648
    %v634 = vor.u32 1.1754944e-38, %v633
    %v635 = vsel %vm632, %v634, %v630
    %v636 = vmul.f32 1.0, %v635
    %v637 = vadd.f32 %v590, %v257
    %v639 = vrot.slane %v637, 5
    %v640 = vrot.slane %v637, 6
    %641 = vrot.lane.b32.xlu0 %v639, 64
    %v642 = vpop.permute.xlu0 %641
    %643 = vrot.lane.b32.xlu0 %v640, 64
    %v644 = vpop.permute.xlu0 %643
    %v647 = vmul.f32 %v621, %v642
    %v648 = vmul.f32 %v636, %v644
    %651 = vrot.lane.b32.xlu0 %v647, 64
    %v652 = vpop.permute.xlu0 %651
    %653 = vrot.lane.b32.xlu0 %v648, 64
    %v654 = vpop.permute.xlu0 %653
    %v657 = vadd.f32 %v181, %v652
    %v658 = vadd.f32 %v184, %v654
    %v659 = vtanh.pop %v657
    %v660 = vtanh.pop %v658
    %v663 = vrot.slane %v659, 1
    %v664 = vrot.slane %v660, 1
    %v667 = vsub.f32 %v561, %v663
    %v668 = vsub.f32 %v562, %v664
    %v671 = vrot.slane %v667, 7
    %v672 = vrot.slane %v668, 7
    %673 = vrot.lane.b32.xlu0 %v671, 96
    %v674 = vpop.permute.xlu0 %673
    %675 = vrot.lane.b32.xlu0 %v672, 96
    %v676 = vpop.permute.xlu0 %675
    %v679 = vmul.f32 %v621, %v674
    %v680 = vmul.f32 %v636, %v676
    %683 = vrot.lane.b32.xlu0 %v679, 32
    %v684 = vpop.permute.xlu0 %683
    %685 = vrot.lane.b32.xlu0 %v680, 32
    %v686 = vpop.permute.xlu0 %685
    %v689 = vadd.f32 %v659, %v684
    %v690 = vadd.f32 %v660, %v686
    %v693 = vrot.slane %v689, 3
    %v694 = vrot.slane %v690, 2
    %v695 = vsel %vm285, %v694, %v693
    %696 = vrot.lane.b32.xlu0 %v695, 64
    %v697 = vpop.permute.xlu0 %696
    %v698 = vsel %vm156, %v697, 0
    %700 = vmatpush.msra.mxu0 0.0
    %701 = vmatpush.msra.mxu0 0.0
    %702 = vmatpush.msra.mxu0 0.0
    %703 = vmatpush.msra.mxu0 0.0
    %704 = vmatpush.msra.mxu0 0.0
    %705 = vmatpush.msra.mxu0 0.0
    %706 = vmatpush.msra.mxu0 0.0
    %707 = vmatpush.msra.mxu0 0.0
    %708 = vmatpush.msra.mxu0 0.0
    %709 = vmatpush.msra.mxu0 0.0
    %710 = vmatpush.msra.mxu0 0.0
    %711 = vmatpush.msra.mxu0 0.0
    %712 = vmatpush.msra.mxu0 %v150
    %713 = vmatpush.msra.mxu0 %v149
    %714 = vmatpush.msra.mxu0 %v148
    %715 = vmatpush.msra.mxu0 %v147
    %716 = vmatmul.f32.gmra.mxu0 %v698
    %v717 = vpop.f32.mrf.mxu0
    %v718 = vadd.f32 0.0, %v717
    %719 = vdwg.mxu0
    %v721 = vrot.slane %v718, 4
    %v722 = vrot.slane %v718, 5
    %v725 = vadd.f32 %v181, %v721
    %v726 = vadd.f32 %v184, %v722
    %v727 = vxor.u32 %v725, 2147483648
    %v728 = vxor.u32 %v726, 2147483648
    %v729 = vmul.f32 %v727, 1.442695
    %v730 = vpow.pop %v729
    %v731 = vmul.f32 %v728, 1.442695
    %v732 = vpow.pop %v731
    %v733 = vadd.f32 %v730, 1.0
    %v734 = vadd.f32 %v732, 1.0
    %v735 = vrcp.pop %v733
    %v736 = vmul.f32 %v733, %v735
    %v737 = vsub.f32 1.0, %v736
    %v738 = vmul.f32 %v735, %v737
    %v739 = vadd.f32 %v735, %v738
    %vm740 = vweird.f32 %v733
    %vm741 = vweird.f32 %v735
    %vm742 = vmor %vm740, %vm741
    %v743 = vsel %vm742, %v735, %v739
    %v744 = vand.u32 2147483647, %v733
    %vm745 = vcmp.eq.f32.partialorder %v744, 8.507059e+37
    %v746 = vand.u32 %v733, 2147483648
    %v747 = vor.u32 1.1754944e-38, %v746
    %v748 = vsel %vm745, %v747, %v743
    %v749 = vmul.f32 1.0, %v748
    %v750 = vrcp.pop %v734
    %v751 = vmul.f32 %v734, %v750
    %v752 = vsub.f32 1.0, %v751
    %v753 = vmul.f32 %v750, %v752
    %v754 = vadd.f32 %v750, %v753
    %vm755 = vweird.f32 %v734
    %vm756 = vweird.f32 %v750
    %vm757 = vmor %vm755, %vm756
    %v758 = vsel %vm757, %v750, %v754
    %v759 = vand.u32 2147483647, %v734
    %vm760 = vcmp.eq.f32.partialorder %v759, 8.507059e+37
    %v761 = vand.u32 %v734, 2147483648
    %v762 = vor.u32 1.1754944e-38, %v761
    %v763 = vsel %vm760, %v762, %v758
    %v764 = vmul.f32 1.0, %v763
    %v765 = vadd.f32 %v718, %v257
    %v767 = vrot.slane %v765, 4
    %v768 = vrot.slane %v765, 5
    %769 = vrot.lane.b32.xlu0 %v767, 64
    %v770 = vpop.permute.xlu0 %769
    %771 = vrot.lane.b32.xlu0 %v768, 64
    %v772 = vpop.permute.xlu0 %771
    %v775 = vmul.f32 %v749, %v770
    %v776 = vmul.f32 %v764, %v772
    %779 = vrot.lane.b32.xlu0 %v775, 64
    %v780 = vpop.permute.xlu0 %779
    %781 = vrot.lane.b32.xlu0 %v776, 64
    %v782 = vpop.permute.xlu0 %781
    %v785 = vadd.f32 %v181, %v780
    %v786 = vadd.f32 %v184, %v782
    %v787 = vtanh.pop %v785
    %v788 = vtanh.pop %v786
    %v791 = vrot.slane %v787, 1
    %v792 = vrot.slane %v788, 1
    %v795 = vsub.f32 %v689, %v791
    %v796 = vsub.f32 %v690, %v792
    %v799 = vrot.slane %v795, 7
    %v800 = vrot.slane %v796, 7
    %801 = vrot.lane.b32.xlu0 %v799, 96
    %v802 = vpop.permute.xlu0 %801
    %803 = vrot.lane.b32.xlu0 %v800, 96
    %v804 = vpop.permute.xlu0 %803
    %v807 = vmul.f32 %v749, %v802
    %v808 = vmul.f32 %v764, %v804
    %811 = vrot.lane.b32.xlu0 %v807, 32
    %v812 = vpop.permute.xlu0 %811
    %813 = vrot.lane.b32.xlu0 %v808, 32
    %v814 = vpop.permute.xlu0 %813
    %v817 = vadd.f32 %v787, %v812
    %v818 = vadd.f32 %v788, %v814
    %v821 = vrot.slane %v817, 4
    %v822 = vrot.slane %v818, 3
    %v823 = vsel %vm285, %v822, %v821
    %824 = vrot.lane.b32.xlu0 %v823, 64
    %v825 = vpop.permute.xlu0 %824
    %v826 = vsel %vm156, %v825, 0
    %828 = vmatpush.msra.mxu0 0.0
    %829 = vmatpush.msra.mxu0 0.0
    %830 = vmatpush.msra.mxu0 0.0
    %831 = vmatpush.msra.mxu0 0.0
    %832 = vmatpush.msra.mxu0 0.0
    %833 = vmatpush.msra.mxu0 0.0
    %834 = vmatpush.msra.mxu0 0.0
    %835 = vmatpush.msra.mxu0 0.0
    %836 = vmatpush.msra.mxu0 0.0
    %837 = vmatpush.msra.mxu0 0.0
    %838 = vmatpush.msra.mxu0 0.0
    %839 = vmatpush.msra.mxu0 0.0
    %840 = vmatpush.msra.mxu0 %v150
    %841 = vmatpush.msra.mxu0 %v149
    %842 = vmatpush.msra.mxu0 %v148
    %843 = vmatpush.msra.mxu0 %v147
    %844 = vmatmul.f32.gmra.mxu0 %v826
    %v845 = vpop.f32.mrf.mxu0
    %v846 = vadd.f32 0.0, %v845
    %847 = vdwg.mxu0
    %v849 = vrot.slane %v846, 3
    %v850 = vrot.slane %v846, 4
    %v853 = vadd.f32 %v181, %v849
    %v854 = vadd.f32 %v184, %v850
    %v855 = vxor.u32 %v853, 2147483648
    %v856 = vxor.u32 %v854, 2147483648
    %v857 = vmul.f32 %v855, 1.442695
    %v858 = vpow.pop %v857
    %v859 = vmul.f32 %v856, 1.442695
    %v860 = vpow.pop %v859
    %v861 = vadd.f32 %v858, 1.0
    %v862 = vadd.f32 %v860, 1.0
    %v863 = vrcp.pop %v861
    %v864 = vmul.f32 %v861, %v863
    %v865 = vsub.f32 1.0, %v864
    %v866 = vmul.f32 %v863, %v865
    %v867 = vadd.f32 %v863, %v866
    %vm868 = vweird.f32 %v861
    %vm869 = vweird.f32 %v863
    %vm870 = vmor %vm868, %vm869
    %v871 = vsel %vm870, %v863, %v867
    %v872 = vand.u32 2147483647, %v861
    %vm873 = vcmp.eq.f32.partialorder %v872, 8.507059e+37
    %v874 = vand.u32 %v861, 2147483648
    %v875 = vor.u32 1.1754944e-38, %v874
    %v876 = vsel %vm873, %v875, %v871
    %v877 = vmul.f32 1.0, %v876
    %v878 = vrcp.pop %v862
    %v879 = vmul.f32 %v862, %v878
    %v880 = vsub.f32 1.0, %v879
    %v881 = vmul.f32 %v878, %v880
    %v882 = vadd.f32 %v878, %v881
    %vm883 = vweird.f32 %v862
    %vm884 = vweird.f32 %v878
    %vm885 = vmor %vm883, %vm884
    %v886 = vsel %vm885, %v878, %v882
    %v887 = vand.u32 2147483647, %v862
    %vm888 = vcmp.eq.f32.partialorder %v887, 8.507059e+37
    %v889 = vand.u32 %v862, 2147483648
    %v890 = vor.u32 1.1754944e-38, %v889
    %v891 = vsel %vm888, %v890, %v886
    %v892 = vmul.f32 1.0, %v891
    %v893 = vadd.f32 %v846, %v257
    %v895 = vrot.slane %v893, 3
    %v896 = vrot.slane %v893, 4
    %897 = vrot.lane.b32.xlu0 %v895, 64
    %v898 = vpop.permute.xlu0 %897
    %899 = vrot.lane.b32.xlu0 %v896, 64
    %v900 = vpop.permute.xlu0 %899
    %v903 = vmul.f32 %v877, %v898
    %v904 = vmul.f32 %v892, %v900
    %907 = vrot.lane.b32.xlu0 %v903, 64
    %v908 = vpop.permute.xlu0 %907
    %909 = vrot.lane.b32.xlu0 %v904, 64
    %v910 = vpop.permute.xlu0 %909
    %v913 = vadd.f32 %v181, %v908
    %v914 = vadd.f32 %v184, %v910
    %v915 = vtanh.pop %v913
    %v916 = vtanh.pop %v914
    %v919 = vrot.slane %v915, 1
    %v920 = vrot.slane %v916, 1
    %v923 = vsub.f32 %v817, %v919
    %v924 = vsub.f32 %v818, %v920
    %v927 = vrot.slane %v923, 7
    %v928 = vrot.slane %v924, 7
    %929 = vrot.lane.b32.xlu0 %v927, 96
    %v930 = vpop.permute.xlu0 %929
    %931 = vrot.lane.b32.xlu0 %v928, 96
    %v932 = vpop.permute.xlu0 %931
    %v935 = vmul.f32 %v877, %v930
    %v936 = vmul.f32 %v892, %v932
    %939 = vrot.lane.b32.xlu0 %v935, 32
    %v940 = vpop.permute.xlu0 %939
    %941 = vrot.lane.b32.xlu0 %v936, 32
    %v942 = vpop.permute.xlu0 %941
    %v945 = vadd.f32 %v915, %v940
    %v946 = vadd.f32 %v916, %v942
    %v949 = vrot.slane %v945, 5
    %v950 = vrot.slane %v946, 4
    %v951 = vsel %vm285, %v950, %v949
    %952 = vrot.lane.b32.xlu0 %v951, 64
    %v953 = vpop.permute.xlu0 %952
    %v954 = vsel %vm156, %v953, 0
    %956 = vmatpush.msra.mxu0 0.0
    %957 = vmatpush.msra.mxu0 0.0
    %958 = vmatpush.msra.mxu0 0.0
    %959 = vmatpush.msra.mxu0 0.0
    %960 = vmatpush.msra.mxu0 0.0
    %961 = vmatpush.msra.mxu0 0.0
    %962 = vmatpush.msra.mxu0 0.0
    %963 = vmatpush.msra.mxu0 0.0
    %964 = vmatpush.msra.mxu0 0.0
    %965 = vmatpush.msra.mxu0 0.0
    %966 = vmatpush.msra.mxu0 0.0
    %967 = vmatpush.msra.mxu0 0.0
    %968 = vmatpush.msra.mxu0 %v150
    %969 = vmatpush.msra.mxu0 %v149
    %970 = vmatpush.msra.mxu0 %v148
    %971 = vmatpush.msra.mxu0 %v147
    %972 = vmatmul.f32.gmra.mxu0 %v954
    %v973 = vpop.f32.mrf.mxu0
    %v974 = vadd.f32 0.0, %v973
    %975 = vdwg.mxu0
    %v977 = vrot.slane %v974, 2
    %v978 = vrot.slane %v974, 3
    %v981 = vadd.f32 %v181, %v977
    %v982 = vadd.f32 %v184, %v978
    %v983 = vxor.u32 %v981, 2147483648
    %v984 = vxor.u32 %v982, 2147483648
    %v985 = vmul.f32 %v983, 1.442695
    %v986 = vpow.pop %v985
    %v987 = vmul.f32 %v984, 1.442695
    %v988 = vpow.pop %v987
    %v989 = vadd.f32 %v986, 1.0
    %v990 = vadd.f32 %v988, 1.0
    %v991 = vrcp.pop %v989
    %v992 = vmul.f32 %v989, %v991
    %v993 = vsub.f32 1.0, %v992
    %v994 = vmul.f32 %v991, %v993
    %v995 = vadd.f32 %v991, %v994
    %vm996 = vweird.f32 %v989
    %vm997 = vweird.f32 %v991
    %vm998 = vmor %vm996, %vm997
    %v999 = vsel %vm998, %v991, %v995
    %v1000 = vand.u32 2147483647, %v989
    %vm1001 = vcmp.eq.f32.partialorder %v1000, 8.507059e+37
    %v1002 = vand.u32 %v989, 2147483648
    %v1003 = vor.u32 1.1754944e-38, %v1002
    %v1004 = vsel %vm1001, %v1003, %v999
    %v1005 = vmul.f32 1.0, %v1004
    %v1006 = vrcp.pop %v990
    %v1007 = vmul.f32 %v990, %v1006
    %v1008 = vsub.f32 1.0, %v1007
    %v1009 = vmul.f32 %v1006, %v1008
    %v1010 = vadd.f32 %v1006, %v1009
    %vm1011 = vweird.f32 %v990
    %vm1012 = vweird.f32 %v1006
    %vm1013 = vmor %vm1011, %vm1012
    %v1014 = vsel %vm1013, %v1006, %v1010
    %v1015 = vand.u32 2147483647, %v990
    %vm1016 = vcmp.eq.f32.partialorder %v1015, 8.507059e+37
    %v1017 = vand.u32 %v990, 2147483648
    %v1018 = vor.u32 1.1754944e-38, %v1017
    %v1019 = vsel %vm1016, %v1018, %v1014
    %v1020 = vmul.f32 1.0, %v1019
    %v1021 = vadd.f32 %v974, %v257
    %v1023 = vrot.slane %v1021, 2
    %v1024 = vrot.slane %v1021, 3
    %1025 = vrot.lane.b32.xlu0 %v1023, 64
    %v1026 = vpop.permute.xlu0 %1025
    %1027 = vrot.lane.b32.xlu0 %v1024, 64
    %v1028 = vpop.permute.xlu0 %1027
    %v1031 = vmul.f32 %v1005, %v1026
    %v1032 = vmul.f32 %v1020, %v1028
    %1035 = vrot.lane.b32.xlu0 %v1031, 64
    %v1036 = vpop.permute.xlu0 %1035
    %1037 = vrot.lane.b32.xlu0 %v1032, 64
    %v1038 = vpop.permute.xlu0 %1037
    %v1041 = vadd.f32 %v181, %v1036
    %v1042 = vadd.f32 %v184, %v1038
    %v1043 = vtanh.pop %v1041
    %v1044 = vtanh.pop %v1042
    %v1047 = vrot.slane %v1043, 1
    %v1048 = vrot.slane %v1044, 1
    %v1051 = vsub.f32 %v945, %v1047
    %v1052 = vsub.f32 %v946, %v1048
    %v1055 = vrot.slane %v1051, 7
    %v1056 = vrot.slane %v1052, 7
    %1057 = vrot.lane.b32.xlu0 %v1055, 96
    %v1058 = vpop.permute.xlu0 %1057
    %1059 = vrot.lane.b32.xlu0 %v1056, 96
    %v1060 = vpop.permute.xlu0 %1059
    %v1063 = vmul.f32 %v1005, %v1058
    %v1064 = vmul.f32 %v1020, %v1060
    %1067 = vrot.lane.b32.xlu0 %v1063, 32
    %v1068 = vpop.permute.xlu0 %1067
    %1069 = vrot.lane.b32.xlu0 %v1064, 32
    %v1070 = vpop.permute.xlu0 %1069
    %v1073 = vadd.f32 %v1043, %v1068
    %v1074 = vadd.f32 %v1044, %v1070
    %v1077 = vrot.slane %v1073, 6
    %v1078 = vrot.slane %v1074, 5
    %v1079 = vsel %vm285, %v1078, %v1077
    %1080 = vrot.lane.b32.xlu0 %v1079, 64
    %v1081 = vpop.permute.xlu0 %1080
    %v1082 = vsel %vm156, %v1081, 0
    %1084 = vmatpush.msra.mxu0 0.0
    %1085 = vmatpush.msra.mxu0 0.0
    %1086 = vmatpush.msra.mxu0 0.0
    %1087 = vmatpush.msra.mxu0 0.0
    %1088 = vmatpush.msra.mxu0 0.0
    %1089 = vmatpush.msra.mxu0 0.0
    %1090 = vmatpush.msra.mxu0 0.0
    %1091 = vmatpush.msra.mxu0 0.0
    %1092 = vmatpush.msra.mxu0 0.0
    %1093 = vmatpush.msra.mxu0 0.0
    %1094 = vmatpush.msra.mxu0 0.0
    %1095 = vmatpush.msra.mxu0 0.0
    %1096 = vmatpush.msra.mxu0 %v150
    %1097 = vmatpush.msra.mxu0 %v149
    %1098 = vmatpush.msra.mxu0 %v148
    %1099 = vmatpush.msra.mxu0 %v147
    %1100 = vmatmul.f32.gmra.mxu0 %v1082
    %v1101 = vpop.f32.mrf.mxu0
    %v1102 = vadd.f32 0.0, %v1101
    %1103 = vdwg.mxu0
    %v1105 = vrot.slane %v1102, 1
    %v1106 = vrot.slane %v1102, 2
    %v1109 = vadd.f32 %v181, %v1105
    %v1110 = vadd.f32 %v184, %v1106
    %v1111 = vxor.u32 %v1109, 2147483648
    %v1112 = vxor.u32 %v1110, 2147483648
    %v1113 = vmul.f32 %v1111, 1.442695
    %v1114 = vpow.pop %v1113
    %v1115 = vmul.f32 %v1112, 1.442695
    %v1116 = vpow.pop %v1115
    %v1117 = vadd.f32 %v1114, 1.0
    %v1118 = vadd.f32 %v1116, 1.0
    %v1119 = vrcp.pop %v1117
    %v1120 = vmul.f32 %v1117, %v1119
    %v1121 = vsub.f32 1.0, %v1120
    %v1122 = vmul.f32 %v1119, %v1121
    %v1123 = vadd.f32 %v1119, %v1122
    %vm1124 = vweird.f32 %v1117
    %vm1125 = vweird.f32 %v1119
    %vm1126 = vmor %vm1124, %vm1125
    %v1127 = vsel %vm1126, %v1119, %v1123
    %v1128 = vand.u32 2147483647, %v1117
    %vm1129 = vcmp.eq.f32.partialorder %v1128, 8.507059e+37
    %v1130 = vand.u32 %v1117, 2147483648
    %v1131 = vor.u32 1.1754944e-38, %v1130
    %v1132 = vsel %vm1129, %v1131, %v1127
    %v1133 = vmul.f32 1.0, %v1132
    %v1134 = vrcp.pop %v1118
    %v1135 = vmul.f32 %v1118, %v1134
    %v1136 = vsub.f32 1.0, %v1135
    %v1137 = vmul.f32 %v1134, %v1136
    %v1138 = vadd.f32 %v1134, %v1137
    %vm1139 = vweird.f32 %v1118
    %vm1140 = vweird.f32 %v1134
    %vm1141 = vmor %vm1139, %vm1140
    %v1142 = vsel %vm1141, %v1134, %v1138
    %v1143 = vand.u32 2147483647, %v1118
    %vm1144 = vcmp.eq.f32.partialorder %v1143, 8.507059e+37
    %v1145 = vand.u32 %v1118, 2147483648
    %v1146 = vor.u32 1.1754944e-38, %v1145
    %v1147 = vsel %vm1144, %v1146, %v1142
    %v1148 = vmul.f32 1.0, %v1147
    %v1149 = vadd.f32 %v1102, %v257
    %v1151 = vrot.slane %v1149, 1
    %v1152 = vrot.slane %v1149, 2
    %1153 = vrot.lane.b32.xlu0 %v1151, 64
    %v1154 = vpop.permute.xlu0 %1153
    %1155 = vrot.lane.b32.xlu0 %v1152, 64
    %v1156 = vpop.permute.xlu0 %1155
    %v1159 = vmul.f32 %v1133, %v1154
    %v1160 = vmul.f32 %v1148, %v1156
    %1163 = vrot.lane.b32.xlu0 %v1159, 64
    %v1164 = vpop.permute.xlu0 %1163
    %1165 = vrot.lane.b32.xlu0 %v1160, 64
    %v1166 = vpop.permute.xlu0 %1165
    %v1169 = vadd.f32 %v181, %v1164
    %v1170 = vadd.f32 %v184, %v1166
    %v1171 = vtanh.pop %v1169
    %v1172 = vtanh.pop %v1170
    %v1175 = vrot.slane %v1171, 1
    %v1176 = vrot.slane %v1172, 1
    %v1179 = vsub.f32 %v1073, %v1175
    %v1180 = vsub.f32 %v1074, %v1176
    %v1183 = vrot.slane %v1179, 7
    %v1184 = vrot.slane %v1180, 7
    %1185 = vrot.lane.b32.xlu0 %v1183, 96
    %v1186 = vpop.permute.xlu0 %1185
    %1187 = vrot.lane.b32.xlu0 %v1184, 96
    %v1188 = vpop.permute.xlu0 %1187
    %v1191 = vmul.f32 %v1133, %v1186
    %v1192 = vmul.f32 %v1148, %v1188
    %1195 = vrot.lane.b32.xlu0 %v1191, 32
    %v1196 = vpop.permute.xlu0 %1195
    %1197 = vrot.lane.b32.xlu0 %v1192, 32
    %v1198 = vpop.permute.xlu0 %1197
    %v1201 = vadd.f32 %v1171, %v1196
    %v1202 = vadd.f32 %v1172, %v1198
    %v1205 = vrot.slane %v1202, 7
    %1206 = vrot.lane.b32.xlu0 %v1201, 64
    %v1207 = vpop.permute.xlu0 %1206
    %1208 = vrot.lane.b32.xlu0 %v1205, 64
    %v1209 = vpop.permute.xlu0 %1208
    %vm1212 = vcmask 261127
    %1213 = vst.msk [vmem:[#allocation9 - $0x7] sm:$0x80] %vm1212, %v1207
    %vm1214 = vcmask 253952
    %1215 = vst.msk [vmem:[#allocation9 + $0x1] sm:$0x1] %vm1214, %v1209
    %vm1216 = vcmask 1040384
    %v1217 = vsel %vm1216, %v309, %v434
    %v1218 = vsel %vm1216, %v310, %v435
    %vm1219 = vcmask 1041408
    %v1220 = vsel %vm1219, %v1217, %v561
    %v1221 = vsel %vm1219, %v1218, %v562
    %vm1222 = vcmask 1042432
    %v1223 = vsel %vm1222, %v1220, %v689
    %v1224 = vsel %vm1222, %v1221, %v690
    %vm1225 = vcmask 1043456
    %v1226 = vsel %vm1225, %v1223, %v817
    %v1227 = vsel %vm1225, %v1224, %v818
    %vm1228 = vcmask 1044480
    %v1229 = vsel %vm1228, %v1226, %v945
    %v1230 = vsel %vm1228, %v1227, %v946
    %vm1231 = vcmask 1045504
    %v1232 = vsel %vm1231, %v1229, %v1073
    %v1233 = vsel %vm1231, %v1230, %v1074
    %vm1234 = vcmask 1046528
    %v1235 = vsel %vm1234, %v1232, %v1201
    %v1236 = vsel %vm1234, %v1233, %v1202
    %v1237 = vld [vmem:[#allocation5] sm:$0xff]
    %v1238 = vld [vmem:[#allocation5 + $0x8] sm:$0xff]
    %v1239 = vld [vmem:[#allocation5 + $0x10] sm:$0xff]
    %v1240 = vld [vmem:[#allocation5 + $0x18] sm:$0xff]
    %v1241 = vld [vmem:[#allocation7] sm:$0xff]
    %v1242 = vld [vmem:[#allocation7 + $0x8] sm:$0xff]
    %v1243 = vld [vmem:[#allocation7 + $0x10] sm:$0xff]
    %v1244 = vld [vmem:[#allocation7 + $0x18] sm:$0xff]
    %v1245 = vld [vmem:[%s9] sm:$0x1]
    %v1246 = vld [vmem:[%s10] sm:$0x1]
    %v1248 = vperm.slane %v1245, 0
    %1252 = vrot.lane.b32.xlu0 %v1235, 64
    %v1253 = vpop.permute.xlu0 %1252
    %1254 = vrot.lane.b32.xlu0 %v1236, 64
    %v1255 = vpop.permute.xlu0 %1254
    %v1256 = vsel %vm156, %v1253, 0
    %v1258 = vsel %vm156, %v1255, 0
    %1260 = vmatpush.msra.mxu0 0.0
    %1261 = vmatpush.msra.mxu0 0.0
    %1262 = vmatpush.msra.mxu0 0.0
    %1263 = vmatpush.msra.mxu0 0.0
    %1264 = vmatpush.msra.mxu0 0.0
    %1265 = vmatpush.msra.mxu0 0.0
    %1266 = vmatpush.msra.mxu0 0.0
    %1267 = vmatpush.msra.mxu0 0.0
    %1268 = vmatpush.msra.mxu0 0.0
    %1269 = vmatpush.msra.mxu0 0.0
    %1270 = vmatpush.msra.mxu0 0.0
    %1271 = vmatpush.msra.mxu0 0.0
    %1272 = vmatpush.msra.mxu0 %v1240
    %1273 = vmatpush.msra.mxu0 %v1239
    %1274 = vmatpush.msra.mxu0 %v1238
    %1275 = vmatpush.msra.mxu0 %v1237
    %1276 = vmatmul.f32.gmra.mxu0 %v1256
    %v1277 = vpop.f32.mrf.mxu0
    %v1278 = vadd.f32 %v1248, %v1277
    %1279 = vmatmul.f32.gmra.mxu0 %v1258
    %v1280 = vpop.f32.mrf.mxu0
    %v1281 = vadd.f32 %v1248, %v1280
    %1282 = vdwg.mxu0
    %s1283 = scalar_lea.vmem %s2, 2
    %v1284 = vld [vmem:[%s1283] sm:$0x3]
    %v1286 = vsel %vm156, %v1284, 0
    %1288 = vmatpush.msra.mxu0 0.0
    %1289 = vmatpush.msra.mxu0 0.0
    %1290 = vmatpush.msra.mxu0 0.0
    %1291 = vmatpush.msra.mxu0 0.0
    %1292 = vmatpush.msra.mxu0 0.0
    %1293 = vmatpush.msra.mxu0 0.0
    %1294 = vmatpush.msra.mxu0 0.0
    %1295 = vmatpush.msra.mxu0 0.0
    %1296 = vmatpush.msra.mxu0 0.0
    %1297 = vmatpush.msra.mxu0 0.0
    %1298 = vmatpush.msra.mxu0 0.0
    %1299 = vmatpush.msra.mxu0 0.0
    %1300 = vmatpush.msra.mxu0 %v1244
    %1301 = vmatpush.msra.mxu0 %v1243
    %1302 = vmatpush.msra.mxu0 %v1242
    %1303 = vmatpush.msra.mxu0 %v1241
    %1304 = vmatmul.f32.gmra.mxu0 %v1286
    %v1305 = vpop.f32.mrf.mxu0
    %v1306 = vadd.f32 0.0, %v1305
    %1307 = vdwg.mxu0
    %v1309 = vrot.slane %v1306, 1
    %v1312 = vadd.f32 %v1278, %v1306
    %v1313 = vadd.f32 %v1281, %v1309
    %v1314 = vxor.u32 %v1312, 2147483648
    %v1315 = vxor.u32 %v1313, 2147483648
    %v1316 = vmul.f32 %v1314, 1.442695
    %v1317 = vpow.pop %v1316
    %v1318 = vmul.f32 %v1315, 1.442695
    %v1319 = vpow.pop %v1318
    %v1320 = vadd.f32 %v1317, 1.0
    %v1321 = vadd.f32 %v1319, 1.0
    %v1322 = vrcp.pop %v1320
    %v1323 = vmul.f32 %v1320, %v1322
    %v1324 = vsub.f32 1.0, %v1323
    %v1325 = vmul.f32 %v1322, %v1324
    %v1326 = vadd.f32 %v1322, %v1325
    %vm1327 = vweird.f32 %v1320
    %vm1328 = vweird.f32 %v1322
    %vm1329 = vmor %vm1327, %vm1328
    %v1330 = vsel %vm1329, %v1322, %v1326
    %v1331 = vand.u32 2147483647, %v1320
    %vm1332 = vcmp.eq.f32.partialorder %v1331, 8.507059e+37
    %v1333 = vand.u32 %v1320, 2147483648
    %v1334 = vor.u32 1.1754944e-38, %v1333
    %v1335 = vsel %vm1332, %v1334, %v1330
    %v1336 = vmul.f32 1.0, %v1335
    %v1337 = vrcp.pop %v1321
    %v1338 = vmul.f32 %v1321, %v1337
    %v1339 = vsub.f32 1.0, %v1338
    %v1340 = vmul.f32 %v1337, %v1339
    %v1341 = vadd.f32 %v1337, %v1340
    %vm1342 = vweird.f32 %v1321
    %vm1343 = vweird.f32 %v1337
    %vm1344 = vmor %vm1342, %vm1343
    %v1345 = vsel %vm1344, %v1337, %v1341
    %v1346 = vand.u32 2147483647, %v1321
    %vm1347 = vcmp.eq.f32.partialorder %v1346, 8.507059e+37
    %v1348 = vand.u32 %v1321, 2147483648
    %v1349 = vor.u32 1.1754944e-38, %v1348
    %v1350 = vsel %vm1347, %v1349, %v1345
    %v1351 = vmul.f32 1.0, %v1350
    %v1353 = vperm.slane %v1246, 0
    %1354 = vrot.lane.b32.xlu0 %v1353, 64
    %v1355 = vpop.permute.xlu0 %1354
    %v1357 = vadd.f32 %v1306, %v1355
    %v1359 = vrot.slane %v1357, 1
    %1360 = vrot.lane.b32.xlu0 %v1357, 64
    %v1361 = vpop.permute.xlu0 %1360
    %1362 = vrot.lane.b32.xlu0 %v1359, 64
    %v1363 = vpop.permute.xlu0 %1362
    %v1366 = vmul.f32 %v1336, %v1361
    %v1367 = vmul.f32 %v1351, %v1363
    %1370 = vrot.lane.b32.xlu0 %v1366, 64
    %v1371 = vpop.permute.xlu0 %1370
    %1372 = vrot.lane.b32.xlu0 %v1367, 64
    %v1373 = vpop.permute.xlu0 %1372
    %v1376 = vadd.f32 %v1278, %v1371
    %v1377 = vadd.f32 %v1281, %v1373
    %v1378 = vtanh.pop %v1376
    %v1379 = vtanh.pop %v1377
    %v1382 = vrot.slane %v1379, 7
    %v1383 = vsel %vm285, %v1382, %v1378
    %1384 = vrot.lane.b32.xlu0 %v1383, 64
    %v1385 = vpop.permute.xlu0 %1384
    %v1387 = vsub.f32 %v1284, %v1385
    %v1389 = vrot.slane %v1387, 1
    %1390 = vrot.lane.b32.xlu0 %v1387, 32
    %v1391 = vpop.permute.xlu0 %1390
    %1392 = vrot.lane.b32.xlu0 %v1389, 32
    %v1393 = vpop.permute.xlu0 %1392
    %v1396 = vmul.f32 %v1336, %v1391
    %v1397 = vmul.f32 %v1351, %v1393
    %1400 = vrot.lane.b32.xlu0 %v1396, 32
    %v1401 = vpop.permute.xlu0 %1400
    %1402 = vrot.lane.b32.xlu0 %v1397, 32
    %v1403 = vpop.permute.xlu0 %1402
    %v1406 = vadd.f32 %v1378, %v1401
    %v1407 = vadd.f32 %v1379, %v1403
    %v1410 = vrot.slane %v1407, 7
    %v1411 = vsel %vm285, %v1410, %v1406
    %1412 = vrot.lane.b32.xlu0 %v1411, 64
    %v1413 = vpop.permute.xlu0 %1412
    %v1414 = vsel %vm156, %v1413, 0
    %1416 = vmatpush.msra.mxu0 0.0
    %1417 = vmatpush.msra.mxu0 0.0
    %1418 = vmatpush.msra.mxu0 0.0
    %1419 = vmatpush.msra.mxu0 0.0
    %1420 = vmatpush.msra.mxu0 0.0
    %1421 = vmatpush.msra.mxu0 0.0
    %1422 = vmatpush.msra.mxu0 0.0
    %1423 = vmatpush.msra.mxu0 0.0
    %1424 = vmatpush.msra.mxu0 0.0
    %1425 = vmatpush.msra.mxu0 0.0
    %1426 = vmatpush.msra.mxu0 0.0
    %1427 = vmatpush.msra.mxu0 0.0
    %1428 = vmatpush.msra.mxu0 %v1244
    %1429 = vmatpush.msra.mxu0 %v1243
    %1430 = vmatpush.msra.mxu0 %v1242
    %1431 = vmatpush.msra.mxu0 %v1241
    %1432 = vmatmul.f32.gmra.mxu0 %v1414
    %v1433 = vpop.f32.mrf.mxu0
    %v1434 = vadd.f32 0.0, %v1433
    %1435 = vdwg.mxu0
    %v1437 = vrot.slane %v1434, 7
    %v1440 = vadd.f32 %v1278, %v1437
    %v1441 = vadd.f32 %v1281, %v1434
    %v1442 = vxor.u32 %v1440, 2147483648
    %v1443 = vxor.u32 %v1441, 2147483648
    %v1444 = vmul.f32 %v1442, 1.442695
    %v1445 = vpow.pop %v1444
    %v1446 = vmul.f32 %v1443, 1.442695
    %v1447 = vpow.pop %v1446
    %v1448 = vadd.f32 %v1445, 1.0
    %v1449 = vadd.f32 %v1447, 1.0
    %v1450 = vrcp.pop %v1448
    %v1451 = vmul.f32 %v1448, %v1450
    %v1452 = vsub.f32 1.0, %v1451
    %v1453 = vmul.f32 %v1450, %v1452
    %v1454 = vadd.f32 %v1450, %v1453
    %vm1455 = vweird.f32 %v1448
    %vm1456 = vweird.f32 %v1450
    %vm1457 = vmor %vm1455, %vm1456
    %v1458 = vsel %vm1457, %v1450, %v1454
    %v1459 = vand.u32 2147483647, %v1448
    %vm1460 = vcmp.eq.f32.partialorder %v1459, 8.507059e+37
    %v1461 = vand.u32 %v1448, 2147483648
    %v1462 = vor.u32 1.1754944e-38, %v1461
    %v1463 = vsel %vm1460, %v1462, %v1458
    %v1464 = vmul.f32 1.0, %v1463
    %v1465 = vrcp.pop %v1449
    %v1466 = vmul.f32 %v1449, %v1465
    %v1467 = vsub.f32 1.0, %v1466
    %v1468 = vmul.f32 %v1465, %v1467
    %v1469 = vadd.f32 %v1465, %v1468
    %vm1470 = vweird.f32 %v1449
    %vm1471 = vweird.f32 %v1465
    %vm1472 = vmor %vm1470, %vm1471
    %v1473 = vsel %vm1472, %v1465, %v1469
    %v1474 = vand.u32 2147483647, %v1449
    %vm1475 = vcmp.eq.f32.partialorder %v1474, 8.507059e+37
    %v1476 = vand.u32 %v1449, 2147483648
    %v1477 = vor.u32 1.1754944e-38, %v1476
    %v1478 = vsel %vm1475, %v1477, %v1473
    %v1479 = vmul.f32 1.0, %v1478
    %v1480 = vadd.f32 %v1434, %v1355
    %v1482 = vrot.slane %v1480, 7
    %1483 = vrot.lane.b32.xlu0 %v1482, 64
    %v1484 = vpop.permute.xlu0 %1483
    %1485 = vrot.lane.b32.xlu0 %v1480, 64
    %v1486 = vpop.permute.xlu0 %1485
    %v1489 = vmul.f32 %v1464, %v1484
    %v1490 = vmul.f32 %v1479, %v1486
    %1493 = vrot.lane.b32.xlu0 %v1489, 64
    %v1494 = vpop.permute.xlu0 %1493
    %1495 = vrot.lane.b32.xlu0 %v1490, 64
    %v1496 = vpop.permute.xlu0 %1495
    %v1499 = vadd.f32 %v1278, %v1494
    %v1500 = vadd.f32 %v1281, %v1496
    %v1501 = vtanh.pop %v1499
    %v1502 = vtanh.pop %v1500
    %v1505 = vrot.slane %v1501, 1
    %v1506 = vrot.slane %v1502, 1
    %v1509 = vsub.f32 %v1406, %v1505
    %v1510 = vsub.f32 %v1407, %v1506
    %v1513 = vrot.slane %v1509, 7
    %v1514 = vrot.slane %v1510, 7
    %1515 = vrot.lane.b32.xlu0 %v1513, 96
    %v1516 = vpop.permute.xlu0 %1515
    %1517 = vrot.lane.b32.xlu0 %v1514, 96
    %v1518 = vpop.permute.xlu0 %1517
    %v1521 = vmul.f32 %v1464, %v1516
    %v1522 = vmul.f32 %v1479, %v1518
    %1525 = vrot.lane.b32.xlu0 %v1521, 32
    %v1526 = vpop.permute.xlu0 %1525
    %1527 = vrot.lane.b32.xlu0 %v1522, 32
    %v1528 = vpop.permute.xlu0 %1527
    %v1531 = vadd.f32 %v1501, %v1526
    %v1532 = vadd.f32 %v1502, %v1528
    %v1535 = vrot.slane %v1531, 1
    %v1536 = vsel %vm285, %v1532, %v1535
    %1537 = vrot.lane.b32.xlu0 %v1536, 64
    %v1538 = vpop.permute.xlu0 %1537
    %v1539 = vsel %vm156, %v1538, 0
    %1541 = vmatpush.msra.mxu0 0.0
    %1542 = vmatpush.msra.mxu0 0.0
    %1543 = vmatpush.msra.mxu0 0.0
    %1544 = vmatpush.msra.mxu0 0.0
    %1545 = vmatpush.msra.mxu0 0.0
    %1546 = vmatpush.msra.mxu0 0.0
    %1547 = vmatpush.msra.mxu0 0.0
    %1548 = vmatpush.msra.mxu0 0.0
    %1549 = vmatpush.msra.mxu0 0.0
    %1550 = vmatpush.msra.mxu0 0.0
    %1551 = vmatpush.msra.mxu0 0.0
    %1552 = vmatpush.msra.mxu0 0.0
    %1553 = vmatpush.msra.mxu0 %v1244
    %1554 = vmatpush.msra.mxu0 %v1243
    %1555 = vmatpush.msra.mxu0 %v1242
    %1556 = vmatpush.msra.mxu0 %v1241
    %1557 = vmatmul.f32.gmra.mxu0 %v1539
    %v1558 = vpop.f32.mrf.mxu0
    %v1559 = vadd.f32 0.0, %v1558
    %1560 = vdwg.mxu0
    %v1562 = vrot.slane %v1559, 6
    %v1563 = vrot.slane %v1559, 7
    %v1566 = vadd.f32 %v1278, %v1562
    %v1567 = vadd.f32 %v1281, %v1563
    %v1568 = vxor.u32 %v1566, 2147483648
    %v1569 = vxor.u32 %v1567, 2147483648
    %v1570 = vmul.f32 %v1568, 1.442695
    %v1571 = vpow.pop %v1570
    %v1572 = vmul.f32 %v1569, 1.442695
    %v1573 = vpow.pop %v1572
    %v1574 = vadd.f32 %v1571, 1.0
    %v1575 = vadd.f32 %v1573, 1.0
    %v1576 = vrcp.pop %v1574
    %v1577 = vmul.f32 %v1574, %v1576
    %v1578 = vsub.f32 1.0, %v1577
    %v1579 = vmul.f32 %v1576, %v1578
    %v1580 = vadd.f32 %v1576, %v1579
    %vm1581 = vweird.f32 %v1574
    %vm1582 = vweird.f32 %v1576
    %vm1583 = vmor %vm1581, %vm1582
    %v1584 = vsel %vm1583, %v1576, %v1580
    %v1585 = vand.u32 2147483647, %v1574
    %vm1586 = vcmp.eq.f32.partialorder %v1585, 8.507059e+37
    %v1587 = vand.u32 %v1574, 2147483648
    %v1588 = vor.u32 1.1754944e-38, %v1587
    %v1589 = vsel %vm1586, %v1588, %v1584
    %v1590 = vmul.f32 1.0, %v1589
    %v1591 = vrcp.pop %v1575
    %v1592 = vmul.f32 %v1575, %v1591
    %v1593 = vsub.f32 1.0, %v1592
    %v1594 = vmul.f32 %v1591, %v1593
    %v1595 = vadd.f32 %v1591, %v1594
    %vm1596 = vweird.f32 %v1575
    %vm1597 = vweird.f32 %v1591
    %vm1598 = vmor %vm1596, %vm1597
    %v1599 = vsel %vm1598, %v1591, %v1595
    %v1600 = vand.u32 2147483647, %v1575
    %vm1601 = vcmp.eq.f32.partialorder %v1600, 8.507059e+37
    %v1602 = vand.u32 %v1575, 2147483648
    %v1603 = vor.u32 1.1754944e-38, %v1602
    %v1604 = vsel %vm1601, %v1603, %v1599
    %v1605 = vmul.f32 1.0, %v1604
    %v1606 = vadd.f32 %v1559, %v1355
    %v1608 = vrot.slane %v1606, 6
    %v1609 = vrot.slane %v1606, 7
    %1610 = vrot.lane.b32.xlu0 %v1608, 64
    %v1611 = vpop.permute.xlu0 %1610
    %1612 = vrot.lane.b32.xlu0 %v1609, 64
    %v1613 = vpop.permute.xlu0 %1612
    %v1616 = vmul.f32 %v1590, %v1611
    %v1617 = vmul.f32 %v1605, %v1613
    %1620 = vrot.lane.b32.xlu0 %v1616, 64
    %v1621 = vpop.permute.xlu0 %1620
    %1622 = vrot.lane.b32.xlu0 %v1617, 64
    %v1623 = vpop.permute.xlu0 %1622
    %v1626 = vadd.f32 %v1278, %v1621
    %v1627 = vadd.f32 %v1281, %v1623
    %v1628 = vtanh.pop %v1626
    %v1629 = vtanh.pop %v1627
    %v1632 = vrot.slane %v1628, 1
    %v1633 = vrot.slane %v1629, 1
    %v1636 = vsub.f32 %v1531, %v1632
    %v1637 = vsub.f32 %v1532, %v1633
    %v1640 = vrot.slane %v1636, 7
    %v1641 = vrot.slane %v1637, 7
    %1642 = vrot.lane.b32.xlu0 %v1640, 96
    %v1643 = vpop.permute.xlu0 %1642
    %1644 = vrot.lane.b32.xlu0 %v1641, 96
    %v1645 = vpop.permute.xlu0 %1644
    %v1648 = vmul.f32 %v1590, %v1643
    %v1649 = vmul.f32 %v1605, %v1645
    %1652 = vrot.lane.b32.xlu0 %v1648, 32
    %v1653 = vpop.permute.xlu0 %1652
    %1654 = vrot.lane.b32.xlu0 %v1649, 32
    %v1655 = vpop.permute.xlu0 %1654
    %v1658 = vadd.f32 %v1628, %v1653
    %v1659 = vadd.f32 %v1629, %v1655
    %v1662 = vrot.slane %v1658, 2
    %v1663 = vrot.slane %v1659, 1
    %v1664 = vsel %vm285, %v1663, %v1662
    %1665 = vrot.lane.b32.xlu0 %v1664, 64
    %v1666 = vpop.permute.xlu0 %1665
    %v1667 = vsel %vm156, %v1666, 0
    %1669 = vmatpush.msra.mxu0 0.0
    %1670 = vmatpush.msra.mxu0 0.0
    %1671 = vmatpush.msra.mxu0 0.0
    %1672 = vmatpush.msra.mxu0 0.0
    %1673 = vmatpush.msra.mxu0 0.0
    %1674 = vmatpush.msra.mxu0 0.0
    %1675 = vmatpush.msra.mxu0 0.0
    %1676 = vmatpush.msra.mxu0 0.0
    %1677 = vmatpush.msra.mxu0 0.0
    %1678 = vmatpush.msra.mxu0 0.0
    %1679 = vmatpush.msra.mxu0 0.0
    %1680 = vmatpush.msra.mxu0 0.0
    %1681 = vmatpush.msra.mxu0 %v1244
    %1682 = vmatpush.msra.mxu0 %v1243
    %1683 = vmatpush.msra.mxu0 %v1242
    %1684 = vmatpush.msra.mxu0 %v1241
    %1685 = vmatmul.f32.gmra.mxu0 %v1667
    %v1686 = vpop.f32.mrf.mxu0
    %v1687 = vadd.f32 0.0, %v1686
    %1688 = vdwg.mxu0
    %v1690 = vrot.slane %v1687, 5
    %v1691 = vrot.slane %v1687, 6
    %v1694 = vadd.f32 %v1278, %v1690
    %v1695 = vadd.f32 %v1281, %v1691
    %v1696 = vxor.u32 %v1694, 2147483648
    %v1697 = vxor.u32 %v1695, 2147483648
    %v1698 = vmul.f32 %v1696, 1.442695
    %v1699 = vpow.pop %v1698
    %v1700 = vmul.f32 %v1697, 1.442695
    %v1701 = vpow.pop %v1700
    %v1702 = vadd.f32 %v1699, 1.0
    %v1703 = vadd.f32 %v1701, 1.0
    %v1704 = vrcp.pop %v1702
    %v1705 = vmul.f32 %v1702, %v1704
    %v1706 = vsub.f32 1.0, %v1705
    %v1707 = vmul.f32 %v1704, %v1706
    %v1708 = vadd.f32 %v1704, %v1707
    %vm1709 = vweird.f32 %v1702
    %vm1710 = vweird.f32 %v1704
    %vm1711 = vmor %vm1709, %vm1710
    %v1712 = vsel %vm1711, %v1704, %v1708
    %v1713 = vand.u32 2147483647, %v1702
    %vm1714 = vcmp.eq.f32.partialorder %v1713, 8.507059e+37
    %v1715 = vand.u32 %v1702, 2147483648
    %v1716 = vor.u32 1.1754944e-38, %v1715
    %v1717 = vsel %vm1714, %v1716, %v1712
    %v1718 = vmul.f32 1.0, %v1717
    %v1719 = vrcp.pop %v1703
    %v1720 = vmul.f32 %v1703, %v1719
    %v1721 = vsub.f32 1.0, %v1720
    %v1722 = vmul.f32 %v1719, %v1721
    %v1723 = vadd.f32 %v1719, %v1722
    %vm1724 = vweird.f32 %v1703
    %vm1725 = vweird.f32 %v1719
    %vm1726 = vmor %vm1724, %vm1725
    %v1727 = vsel %vm1726, %v1719, %v1723
    %v1728 = vand.u32 2147483647, %v1703
    %vm1729 = vcmp.eq.f32.partialorder %v1728, 8.507059e+37
    %v1730 = vand.u32 %v1703, 2147483648
    %v1731 = vor.u32 1.1754944e-38, %v1730
    %v1732 = vsel %vm1729, %v1731, %v1727
    %v1733 = vmul.f32 1.0, %v1732
    %v1734 = vadd.f32 %v1687, %v1355
    %v1736 = vrot.slane %v1734, 5
    %v1737 = vrot.slane %v1734, 6
    %1738 = vrot.lane.b32.xlu0 %v1736, 64
    %v1739 = vpop.permute.xlu0 %1738
    %1740 = vrot.lane.b32.xlu0 %v1737, 64
    %v1741 = vpop.permute.xlu0 %1740
    %v1744 = vmul.f32 %v1718, %v1739
    %v1745 = vmul.f32 %v1733, %v1741
    %1748 = vrot.lane.b32.xlu0 %v1744, 64
    %v1749 = vpop.permute.xlu0 %1748
    %1750 = vrot.lane.b32.xlu0 %v1745, 64
    %v1751 = vpop.permute.xlu0 %1750
    %v1754 = vadd.f32 %v1278, %v1749
    %v1755 = vadd.f32 %v1281, %v1751
    %v1756 = vtanh.pop %v1754
    %v1757 = vtanh.pop %v1755
    %v1760 = vrot.slane %v1756, 1
    %v1761 = vrot.slane %v1757, 1
    %v1764 = vsub.f32 %v1658, %v1760
    %v1765 = vsub.f32 %v1659, %v1761
    %v1768 = vrot.slane %v1764, 7
    %v1769 = vrot.slane %v1765, 7
    %1770 = vrot.lane.b32.xlu0 %v1768, 96
    %v1771 = vpop.permute.xlu0 %1770
    %1772 = vrot.lane.b32.xlu0 %v1769, 96
    %v1773 = vpop.permute.xlu0 %1772
    %v1776 = vmul.f32 %v1718, %v1771
    %v1777 = vmul.f32 %v1733, %v1773
    %1780 = vrot.lane.b32.xlu0 %v1776, 32
    %v1781 = vpop.permute.xlu0 %1780
    %1782 = vrot.lane.b32.xlu0 %v1777, 32
    %v1783 = vpop.permute.xlu0 %1782
    %v1786 = vadd.f32 %v1756, %v1781
    %v1787 = vadd.f32 %v1757, %v1783
    %v1790 = vrot.slane %v1786, 3
    %v1791 = vrot.slane %v1787, 2
    %v1792 = vsel %vm285, %v1791, %v1790
    %1793 = vrot.lane.b32.xlu0 %v1792, 64
    %v1794 = vpop.permute.xlu0 %1793
    %v1795 = vsel %vm156, %v1794, 0
    %1797 = vmatpush.msra.mxu0 0.0
    %1798 = vmatpush.msra.mxu0 0.0
    %1799 = vmatpush.msra.mxu0 0.0
    %1800 = vmatpush.msra.mxu0 0.0
    %1801 = vmatpush.msra.mxu0 0.0
    %1802 = vmatpush.msra.mxu0 0.0
    %1803 = vmatpush.msra.mxu0 0.0
    %1804 = vmatpush.msra.mxu0 0.0
    %1805 = vmatpush.msra.mxu0 0.0
    %1806 = vmatpush.msra.mxu0 0.0
    %1807 = vmatpush.msra.mxu0 0.0
    %1808 = vmatpush.msra.mxu0 0.0
    %1809 = vmatpush.msra.mxu0 %v1244
    %1810 = vmatpush.msra.mxu0 %v1243
    %1811 = vmatpush.msra.mxu0 %v1242
    %1812 = vmatpush.msra.mxu0 %v1241
    %1813 = vmatmul.f32.gmra.mxu0 %v1795
    %v1814 = vpop.f32.mrf.mxu0
    %v1815 = vadd.f32 0.0, %v1814
    %1816 = vdwg.mxu0
    %v1818 = vrot.slane %v1815, 4
    %v1819 = vrot.slane %v1815, 5
    %v1822 = vadd.f32 %v1278, %v1818
    %v1823 = vadd.f32 %v1281, %v1819
    %v1824 = vxor.u32 %v1822, 2147483648
    %v1825 = vxor.u32 %v1823, 2147483648
    %v1826 = vmul.f32 %v1824, 1.442695
    %v1827 = vpow.pop %v1826
    %v1828 = vmul.f32 %v1825, 1.442695
    %v1829 = vpow.pop %v1828
    %v1830 = vadd.f32 %v1827, 1.0
    %v1831 = vadd.f32 %v1829, 1.0
    %v1832 = vrcp.pop %v1830
    %v1833 = vmul.f32 %v1830, %v1832
    %v1834 = vsub.f32 1.0, %v1833
    %v1835 = vmul.f32 %v1832, %v1834
    %v1836 = vadd.f32 %v1832, %v1835
    %vm1837 = vweird.f32 %v1830
    %vm1838 = vweird.f32 %v1832
    %vm1839 = vmor %vm1837, %vm1838
    %v1840 = vsel %vm1839, %v1832, %v1836
    %v1841 = vand.u32 2147483647, %v1830
    %vm1842 = vcmp.eq.f32.partialorder %v1841, 8.507059e+37
    %v1843 = vand.u32 %v1830, 2147483648
    %v1844 = vor.u32 1.1754944e-38, %v1843
    %v1845 = vsel %vm1842, %v1844, %v1840
    %v1846 = vmul.f32 1.0, %v1845
    %v1847 = vrcp.pop %v1831
    %v1848 = vmul.f32 %v1831, %v1847
    %v1849 = vsub.f32 1.0, %v1848
    %v1850 = vmul.f32 %v1847, %v1849
    %v1851 = vadd.f32 %v1847, %v1850
    %vm1852 = vweird.f32 %v1831
    %vm1853 = vweird.f32 %v1847
    %vm1854 = vmor %vm1852, %vm1853
    %v1855 = vsel %vm1854, %v1847, %v1851
    %v1856 = vand.u32 2147483647, %v1831
    %vm1857 = vcmp.eq.f32.partialorder %v1856, 8.507059e+37
    %v1858 = vand.u32 %v1831, 2147483648
    %v1859 = vor.u32 1.1754944e-38, %v1858
    %v1860 = vsel %vm1857, %v1859, %v1855
    %v1861 = vmul.f32 1.0, %v1860
    %v1862 = vadd.f32 %v1815, %v1355
    %v1864 = vrot.slane %v1862, 4
    %v1865 = vrot.slane %v1862, 5
    %1866 = vrot.lane.b32.xlu0 %v1864, 64
    %v1867 = vpop.permute.xlu0 %1866
    %1868 = vrot.lane.b32.xlu0 %v1865, 64
    %v1869 = vpop.permute.xlu0 %1868
    %v1872 = vmul.f32 %v1846, %v1867
    %v1873 = vmul.f32 %v1861, %v1869
    %1876 = vrot.lane.b32.xlu0 %v1872, 64
    %v1877 = vpop.permute.xlu0 %1876
    %1878 = vrot.lane.b32.xlu0 %v1873, 64
    %v1879 = vpop.permute.xlu0 %1878
    %v1882 = vadd.f32 %v1278, %v1877
    %v1883 = vadd.f32 %v1281, %v1879
    %v1884 = vtanh.pop %v1882
    %v1885 = vtanh.pop %v1883
    %v1888 = vrot.slane %v1884, 1
    %v1889 = vrot.slane %v1885, 1
    %v1892 = vsub.f32 %v1786, %v1888
    %v1893 = vsub.f32 %v1787, %v1889
    %v1896 = vrot.slane %v1892, 7
    %v1897 = vrot.slane %v1893, 7
    %1898 = vrot.lane.b32.xlu0 %v1896, 96
    %v1899 = vpop.permute.xlu0 %1898
    %1900 = vrot.lane.b32.xlu0 %v1897, 96
    %v1901 = vpop.permute.xlu0 %1900
    %v1904 = vmul.f32 %v1846, %v1899
    %v1905 = vmul.f32 %v1861, %v1901
    %1908 = vrot.lane.b32.xlu0 %v1904, 32
    %v1909 = vpop.permute.xlu0 %1908
    %1910 = vrot.lane.b32.xlu0 %v1905, 32
    %v1911 = vpop.permute.xlu0 %1910
    %v1914 = vadd.f32 %v1884, %v1909
    %v1915 = vadd.f32 %v1885, %v1911
    %v1918 = vrot.slane %v1914, 4
    %v1919 = vrot.slane %v1915, 3
    %v1920 = vsel %vm285, %v1919, %v1918
    %1921 = vrot.lane.b32.xlu0 %v1920, 64
    %v1922 = vpop.permute.xlu0 %1921
    %v1923 = vsel %vm156, %v1922, 0
    %1925 = vmatpush.msra.mxu0 0.0
    %1926 = vmatpush.msra.mxu0 0.0
    %1927 = vmatpush.msra.mxu0 0.0
    %1928 = vmatpush.msra.mxu0 0.0
    %1929 = vmatpush.msra.mxu0 0.0
    %1930 = vmatpush.msra.mxu0 0.0
    %1931 = vmatpush.msra.mxu0 0.0
    %1932 = vmatpush.msra.mxu0 0.0
    %1933 = vmatpush.msra.mxu0 0.0
    %1934 = vmatpush.msra.mxu0 0.0
    %1935 = vmatpush.msra.mxu0 0.0
    %1936 = vmatpush.msra.mxu0 0.0
    %1937 = vmatpush.msra.mxu0 %v1244
    %1938 = vmatpush.msra.mxu0 %v1243
    %1939 = vmatpush.msra.mxu0 %v1242
    %1940 = vmatpush.msra.mxu0 %v1241
    %1941 = vmatmul.f32.gmra.mxu0 %v1923
    %v1942 = vpop.f32.mrf.mxu0
    %v1943 = vadd.f32 0.0, %v1942
    %1944 = vdwg.mxu0
    %v1946 = vrot.slane %v1943, 3
    %v1947 = vrot.slane %v1943, 4
    %v1950 = vadd.f32 %v1278, %v1946
    %v1951 = vadd.f32 %v1281, %v1947
    %v1952 = vxor.u32 %v1950, 2147483648
    %v1953 = vxor.u32 %v1951, 2147483648
    %v1954 = vmul.f32 %v1952, 1.442695
    %v1955 = vpow.pop %v1954
    %v1956 = vmul.f32 %v1953, 1.442695
    %v1957 = vpow.pop %v1956
    %v1958 = vadd.f32 %v1955, 1.0
    %v1959 = vadd.f32 %v1957, 1.0
    %v1960 = vrcp.pop %v1958
    %v1961 = vmul.f32 %v1958, %v1960
    %v1962 = vsub.f32 1.0, %v1961
    %v1963 = vmul.f32 %v1960, %v1962
    %v1964 = vadd.f32 %v1960, %v1963
    %vm1965 = vweird.f32 %v1958
    %vm1966 = vweird.f32 %v1960
    %vm1967 = vmor %vm1965, %vm1966
    %v1968 = vsel %vm1967, %v1960, %v1964
    %v1969 = vand.u32 2147483647, %v1958
    %vm1970 = vcmp.eq.f32.partialorder %v1969, 8.507059e+37
    %v1971 = vand.u32 %v1958, 2147483648
    %v1972 = vor.u32 1.1754944e-38, %v1971
    %v1973 = vsel %vm1970, %v1972, %v1968
    %v1974 = vmul.f32 1.0, %v1973
    %v1975 = vrcp.pop %v1959
    %v1976 = vmul.f32 %v1959, %v1975
    %v1977 = vsub.f32 1.0, %v1976
    %v1978 = vmul.f32 %v1975, %v1977
    %v1979 = vadd.f32 %v1975, %v1978
    %vm1980 = vweird.f32 %v1959
    %vm1981 = vweird.f32 %v1975
    %vm1982 = vmor %vm1980, %vm1981
    %v1983 = vsel %vm1982, %v1975, %v1979
    %v1984 = vand.u32 2147483647, %v1959
    %vm1985 = vcmp.eq.f32.partialorder %v1984, 8.507059e+37
    %v1986 = vand.u32 %v1959, 2147483648
    %v1987 = vor.u32 1.1754944e-38, %v1986
    %v1988 = vsel %vm1985, %v1987, %v1983
    %v1989 = vmul.f32 1.0, %v1988
    %v1990 = vadd.f32 %v1943, %v1355
    %v1992 = vrot.slane %v1990, 3
    %v1993 = vrot.slane %v1990, 4
    %1994 = vrot.lane.b32.xlu0 %v1992, 64
    %v1995 = vpop.permute.xlu0 %1994
    %1996 = vrot.lane.b32.xlu0 %v1993, 64
    %v1997 = vpop.permute.xlu0 %1996
    %v2000 = vmul.f32 %v1974, %v1995
    %v2001 = vmul.f32 %v1989, %v1997
    %2004 = vrot.lane.b32.xlu0 %v2000, 64
    %v2005 = vpop.permute.xlu0 %2004
    %2006 = vrot.lane.b32.xlu0 %v2001, 64
    %v2007 = vpop.permute.xlu0 %2006
    %v2010 = vadd.f32 %v1278, %v2005
    %v2011 = vadd.f32 %v1281, %v2007
    %v2012 = vtanh.pop %v2010
    %v2013 = vtanh.pop %v2011
    %v2016 = vrot.slane %v2012, 1
    %v2017 = vrot.slane %v2013, 1
    %v2020 = vsub.f32 %v1914, %v2016
    %v2021 = vsub.f32 %v1915, %v2017
    %v2024 = vrot.slane %v2020, 7
    %v2025 = vrot.slane %v2021, 7
    %2026 = vrot.lane.b32.xlu0 %v2024, 96
    %v2027 = vpop.permute.xlu0 %2026
    %2028 = vrot.lane.b32.xlu0 %v2025, 96
    %v2029 = vpop.permute.xlu0 %2028
    %v2032 = vmul.f32 %v1974, %v2027
    %v2033 = vmul.f32 %v1989, %v2029
    %2036 = vrot.lane.b32.xlu0 %v2032, 32
    %v2037 = vpop.permute.xlu0 %2036
    %2038 = vrot.lane.b32.xlu0 %v2033, 32
    %v2039 = vpop.permute.xlu0 %2038
    %v2042 = vadd.f32 %v2012, %v2037
    %v2043 = vadd.f32 %v2013, %v2039
    %v2046 = vrot.slane %v2042, 5
    %v2047 = vrot.slane %v2043, 4
    %v2048 = vsel %vm285, %v2047, %v2046
    %2049 = vrot.lane.b32.xlu0 %v2048, 64
    %v2050 = vpop.permute.xlu0 %2049
    %v2051 = vsel %vm156, %v2050, 0
    %2053 = vmatpush.msra.mxu0 0.0
    %2054 = vmatpush.msra.mxu0 0.0
    %2055 = vmatpush.msra.mxu0 0.0
    %2056 = vmatpush.msra.mxu0 0.0
    %2057 = vmatpush.msra.mxu0 0.0
    %2058 = vmatpush.msra.mxu0 0.0
    %2059 = vmatpush.msra.mxu0 0.0
    %2060 = vmatpush.msra.mxu0 0.0
    %2061 = vmatpush.msra.mxu0 0.0
    %2062 = vmatpush.msra.mxu0 0.0
    %2063 = vmatpush.msra.mxu0 0.0
    %2064 = vmatpush.msra.mxu0 0.0
    %2065 = vmatpush.msra.mxu0 %v1244
    %2066 = vmatpush.msra.mxu0 %v1243
    %2067 = vmatpush.msra.mxu0 %v1242
    %2068 = vmatpush.msra.mxu0 %v1241
    %2069 = vmatmul.f32.gmra.mxu0 %v2051
    %v2070 = vpop.f32.mrf.mxu0
    %v2071 = vadd.f32 0.0, %v2070
    %2072 = vdwg.mxu0
    %v2074 = vrot.slane %v2071, 2
    %v2075 = vrot.slane %v2071, 3
    %v2078 = vadd.f32 %v1278, %v2074
    %v2079 = vadd.f32 %v1281, %v2075
    %v2080 = vxor.u32 %v2078, 2147483648
    %v2081 = vxor.u32 %v2079, 2147483648
    %v2082 = vmul.f32 %v2080, 1.442695
    %v2083 = vpow.pop %v2082
    %v2084 = vmul.f32 %v2081, 1.442695
    %v2085 = vpow.pop %v2084
    %v2086 = vadd.f32 %v2083, 1.0
    %v2087 = vadd.f32 %v2085, 1.0
    %v2088 = vrcp.pop %v2086
    %v2089 = vmul.f32 %v2086, %v2088
    %v2090 = vsub.f32 1.0, %v2089
    %v2091 = vmul.f32 %v2088, %v2090
    %v2092 = vadd.f32 %v2088, %v2091
    %vm2093 = vweird.f32 %v2086
    %vm2094 = vweird.f32 %v2088
    %vm2095 = vmor %vm2093, %vm2094
    %v2096 = vsel %vm2095, %v2088, %v2092
    %v2097 = vand.u32 2147483647, %v2086
    %vm2098 = vcmp.eq.f32.partialorder %v2097, 8.507059e+37
    %v2099 = vand.u32 %v2086, 2147483648
    %v2100 = vor.u32 1.1754944e-38, %v2099
    %v2101 = vsel %vm2098, %v2100, %v2096
    %v2102 = vmul.f32 1.0, %v2101
    %v2103 = vrcp.pop %v2087
    %v2104 = vmul.f32 %v2087, %v2103
    %v2105 = vsub.f32 1.0, %v2104
    %v2106 = vmul.f32 %v2103, %v2105
    %v2107 = vadd.f32 %v2103, %v2106
    %vm2108 = vweird.f32 %v2087
    %vm2109 = vweird.f32 %v2103
    %vm2110 = vmor %vm2108, %vm2109
    %v2111 = vsel %vm2110, %v2103, %v2107
    %v2112 = vand.u32 2147483647, %v2087
    %vm2113 = vcmp.eq.f32.partialorder %v2112, 8.507059e+37
    %v2114 = vand.u32 %v2087, 2147483648
    %v2115 = vor.u32 1.1754944e-38, %v2114
    %v2116 = vsel %vm2113, %v2115, %v2111
    %v2117 = vmul.f32 1.0, %v2116
    %v2118 = vadd.f32 %v2071, %v1355
    %v2120 = vrot.slane %v2118, 2
    %v2121 = vrot.slane %v2118, 3
    %2122 = vrot.lane.b32.xlu0 %v2120, 64
    %v2123 = vpop.permute.xlu0 %2122
    %2124 = vrot.lane.b32.xlu0 %v2121, 64
    %v2125 = vpop.permute.xlu0 %2124
    %v2128 = vmul.f32 %v2102, %v2123
    %v2129 = vmul.f32 %v2117, %v2125
    %2132 = vrot.lane.b32.xlu0 %v2128, 64
    %v2133 = vpop.permute.xlu0 %2132
    %2134 = vrot.lane.b32.xlu0 %v2129, 64
    %v2135 = vpop.permute.xlu0 %2134
    %v2138 = vadd.f32 %v1278, %v2133
    %v2139 = vadd.f32 %v1281, %v2135
    %v2140 = vtanh.pop %v2138
    %v2141 = vtanh.pop %v2139
    %v2144 = vrot.slane %v2140, 1
    %v2145 = vrot.slane %v2141, 1
    %v2148 = vsub.f32 %v2042, %v2144
    %v2149 = vsub.f32 %v2043, %v2145
    %v2152 = vrot.slane %v2148, 7
    %v2153 = vrot.slane %v2149, 7
    %2154 = vrot.lane.b32.xlu0 %v2152, 96
    %v2155 = vpop.permute.xlu0 %2154
    %2156 = vrot.lane.b32.xlu0 %v2153, 96
    %v2157 = vpop.permute.xlu0 %2156
    %v2160 = vmul.f32 %v2102, %v2155
    %v2161 = vmul.f32 %v2117, %v2157
    %2164 = vrot.lane.b32.xlu0 %v2160, 32
    %v2165 = vpop.permute.xlu0 %2164
    %2166 = vrot.lane.b32.xlu0 %v2161, 32
    %v2167 = vpop.permute.xlu0 %2166
    %v2170 = vadd.f32 %v2140, %v2165
    %v2171 = vadd.f32 %v2141, %v2167
    %v2174 = vrot.slane %v2170, 6
    %v2175 = vrot.slane %v2171, 5
    %v2176 = vsel %vm285, %v2175, %v2174
    %2177 = vrot.lane.b32.xlu0 %v2176, 64
    %v2178 = vpop.permute.xlu0 %2177
    %v2179 = vsel %vm156, %v2178, 0
    %2181 = vmatpush.msra.mxu0 0.0
    %2182 = vmatpush.msra.mxu0 0.0
    %2183 = vmatpush.msra.mxu0 0.0
    %2184 = vmatpush.msra.mxu0 0.0
    %2185 = vmatpush.msra.mxu0 0.0
    %2186 = vmatpush.msra.mxu0 0.0
    %2187 = vmatpush.msra.mxu0 0.0
    %2188 = vmatpush.msra.mxu0 0.0
    %2189 = vmatpush.msra.mxu0 0.0
    %2190 = vmatpush.msra.mxu0 0.0
    %2191 = vmatpush.msra.mxu0 0.0
    %2192 = vmatpush.msra.mxu0 0.0
    %2193 = vmatpush.msra.mxu0 %v1244
    %2194 = vmatpush.msra.mxu0 %v1243
    %2195 = vmatpush.msra.mxu0 %v1242
    %2196 = vmatpush.msra.mxu0 %v1241
    %2197 = vmatmul.f32.gmra.mxu0 %v2179
    %v2198 = vpop.f32.mrf.mxu0
    %v2199 = vadd.f32 0.0, %v2198
    %2200 = vdwg.mxu0
    %v2202 = vrot.slane %v2199, 1
    %v2203 = vrot.slane %v2199, 2
    %v2206 = vadd.f32 %v1278, %v2202
    %v2207 = vadd.f32 %v1281, %v2203
    %v2208 = vxor.u32 %v2206, 2147483648
    %v2209 = vxor.u32 %v2207, 2147483648
    %v2210 = vmul.f32 %v2208, 1.442695
    %v2211 = vpow.pop %v2210
    %v2212 = vmul.f32 %v2209, 1.442695
    %v2213 = vpow.pop %v2212
    %v2214 = vadd.f32 %v2211, 1.0
    %v2215 = vadd.f32 %v2213, 1.0
    %v2216 = vrcp.pop %v2214
    %v2217 = vmul.f32 %v2214, %v2216
    %v2218 = vsub.f32 1.0, %v2217
    %v2219 = vmul.f32 %v2216, %v2218
    %v2220 = vadd.f32 %v2216, %v2219
    %vm2221 = vweird.f32 %v2214
    %vm2222 = vweird.f32 %v2216
    %vm2223 = vmor %vm2221, %vm2222
    %v2224 = vsel %vm2223, %v2216, %v2220
    %v2225 = vand.u32 2147483647, %v2214
    %vm2226 = vcmp.eq.f32.partialorder %v2225, 8.507059e+37
    %v2227 = vand.u32 %v2214, 2147483648
    %v2228 = vor.u32 1.1754944e-38, %v2227
    %v2229 = vsel %vm2226, %v2228, %v2224
    %v2230 = vmul.f32 1.0, %v2229
    %v2231 = vrcp.pop %v2215
    %v2232 = vmul.f32 %v2215, %v2231
    %v2233 = vsub.f32 1.0, %v2232
    %v2234 = vmul.f32 %v2231, %v2233
    %v2235 = vadd.f32 %v2231, %v2234
    %vm2236 = vweird.f32 %v2215
    %vm2237 = vweird.f32 %v2231
    %vm2238 = vmor %vm2236, %vm2237
    %v2239 = vsel %vm2238, %v2231, %v2235
    %v2240 = vand.u32 2147483647, %v2215
    %vm2241 = vcmp.eq.f32.partialorder %v2240, 8.507059e+37
    %v2242 = vand.u32 %v2215, 2147483648
    %v2243 = vor.u32 1.1754944e-38, %v2242
    %v2244 = vsel %vm2241, %v2243, %v2239
    %v2245 = vmul.f32 1.0, %v2244
    %v2246 = vadd.f32 %v2199, %v1355
    %v2248 = vrot.slane %v2246, 1
    %v2249 = vrot.slane %v2246, 2
    %2250 = vrot.lane.b32.xlu0 %v2248, 64
    %v2251 = vpop.permute.xlu0 %2250
    %2252 = vrot.lane.b32.xlu0 %v2249, 64
    %v2253 = vpop.permute.xlu0 %2252
    %v2256 = vmul.f32 %v2230, %v2251
    %v2257 = vmul.f32 %v2245, %v2253
    %2260 = vrot.lane.b32.xlu0 %v2256, 64
    %v2261 = vpop.permute.xlu0 %2260
    %2262 = vrot.lane.b32.xlu0 %v2257, 64
    %v2263 = vpop.permute.xlu0 %2262
    %v2266 = vadd.f32 %v1278, %v2261
    %v2267 = vadd.f32 %v1281, %v2263
    %v2268 = vtanh.pop %v2266
    %v2269 = vtanh.pop %v2267
    %v2272 = vrot.slane %v2268, 1
    %v2273 = vrot.slane %v2269, 1
    %v2276 = vsub.f32 %v2170, %v2272
    %v2277 = vsub.f32 %v2171, %v2273
    %v2280 = vrot.slane %v2276, 7
    %v2281 = vrot.slane %v2277, 7
    %2282 = vrot.lane.b32.xlu0 %v2280, 96
    %v2283 = vpop.permute.xlu0 %2282
    %2284 = vrot.lane.b32.xlu0 %v2281, 96
    %v2285 = vpop.permute.xlu0 %2284
    %v2288 = vmul.f32 %v2230, %v2283
    %v2289 = vmul.f32 %v2245, %v2285
    %2292 = vrot.lane.b32.xlu0 %v2288, 32
    %v2293 = vpop.permute.xlu0 %2292
    %2294 = vrot.lane.b32.xlu0 %v2289, 32
    %v2295 = vpop.permute.xlu0 %2294
    %v2298 = vadd.f32 %v2268, %v2293
    %v2299 = vadd.f32 %v2269, %v2295
    %v2302 = vrot.slane %v2299, 7
    %2303 = vrot.lane.b32.xlu0 %v2298, 64
    %v2304 = vpop.permute.xlu0 %2303
    %2305 = vrot.lane.b32.xlu0 %v2302, 64
    %v2306 = vpop.permute.xlu0 %2305
    %s2309 = scalar_lea.vmem [#allocation9], 2
    %2310 = vst.msk [vmem:[%s2309 - $0x7] sm:$0x80] %vm1212, %v2304
    %2311 = vst.msk [vmem:[%s2309 + $0x1] sm:$0x1] %vm1214, %v2306
    %v2312 = vsel %vm1216, %v1406, %v1531
    %v2313 = vsel %vm1216, %v1407, %v1532
    %v2314 = vsel %vm1219, %v2312, %v1658
    %v2315 = vsel %vm1219, %v2313, %v1659
    %v2316 = vsel %vm1222, %v2314, %v1786
    %v2317 = vsel %vm1222, %v2315, %v1787
    %v2318 = vsel %vm1225, %v2316, %v1914
    %v2319 = vsel %vm1225, %v2317, %v1915
    %v2320 = vsel %vm1228, %v2318, %v2042
    %v2321 = vsel %vm1228, %v2319, %v2043
    %v2322 = vsel %vm1231, %v2320, %v2170
    %v2323 = vsel %vm1231, %v2321, %v2171
    %v2324 = vsel %vm1234, %v2322, %v2298
    %v2325 = vsel %vm1234, %v2323, %v2299
    %v2326 = vld [vmem:[%s11] sm:$0xff]
    %v2327 = vld [vmem:[%s11 + $0x8] sm:$0xff]
    %v2328 = vld [vmem:[%s11 + $0x10] sm:$0xff]
    %v2329 = vld [vmem:[%s11 + $0x18] sm:$0xff]
    %v2330 = vld [vmem:[%s12] sm:$0x1]
    %v2332 = vperm.slane %v2330, 0
    %2336 = vrot.lane.b32.xlu0 %v2324, 64
    %v2337 = vpop.permute.xlu0 %2336
    %2338 = vrot.lane.b32.xlu0 %v2325, 64
    %v2339 = vpop.permute.xlu0 %2338
    %v2340 = vsel %vm156, %v2337, 0
    %v2342 = vsel %vm156, %v2339, 0
    %2344 = vmatpush.msra.mxu0 0.0
    %2345 = vmatpush.msra.mxu0 0.0
    %2346 = vmatpush.msra.mxu0 0.0
    %2347 = vmatpush.msra.mxu0 0.0
    %2348 = vmatpush.msra.mxu0 0.0
    %2349 = vmatpush.msra.mxu0 0.0
    %2350 = vmatpush.msra.mxu0 0.0
    %2351 = vmatpush.msra.mxu0 0.0
    %2352 = vmatpush.msra.mxu0 0.0
    %2353 = vmatpush.msra.mxu0 0.0
    %2354 = vmatpush.msra.mxu0 0.0
    %2355 = vmatpush.msra.mxu0 0.0
    %2356 = vmatpush.msra.mxu0 %v2329
    %2357 = vmatpush.msra.mxu0 %v2328
    %2358 = vmatpush.msra.mxu0 %v2327
    %2359 = vmatpush.msra.mxu0 %v2326
    %2360 = vmatmul.f32.gmra.mxu0 %v2340
    %v2361 = vpop.f32.mrf.mxu0
    %v2362 = vadd.f32 %v2332, %v2361
    %2363 = vmatmul.f32.gmra.mxu0 %v2342
    %v2364 = vpop.f32.mrf.mxu0
    %v2365 = vadd.f32 %v2332, %v2364
    %2366 = vdwg.mxu0
    %2367 = vst.msk [vmem:[#allocation8] sm:$0xff] %vm113, %v2362
    %2368 = vst.msk [vmem:[#allocation8 + $0x8] sm:$0xff] %vm113, %v2365
    // Predicated region
    $region66: #{decoder_forward.1} parent=1 // pred_check
      _
    $region67: #{decoder_forward.1} parent=1 // pred_check_branch
      %2370 = sbr.rel (0) target = $region69
    $region68: #{decoder_forward.1} parent=1 // pred_region
      %2372 = vsyncadd [#allocation4], 0
      %s2373 = sshll.u32 [#allocation8], 4
      %s2374 = int_to_ptr.vmem [resolvable:$true] %s2373
      %s2375 = sshll.u32 %s13, 4
      %s2376 = int_to_ptr.hbm [resolvable:$true] %s2375
      %2381 = dma.vmem_to_hbm [thread:$0]  %s2374, 256, %s2376, [#allocation4], 128, 128, 8
    $region69: #{decoder_forward.1} parent=1 // pred_fallthru
      _
    // Predicated region
    $region70: #{decoder_forward.1} parent=1 // pred_check
      _
    $region71: #{decoder_forward.1} parent=1 // pred_check_branch
      %2383 = sbr.rel (0) target = $region73
    $region72: #{decoder_forward.1} parent=1 // pred_region
      %2385 = vsyncadd [#allocation10], 0
      %s2386 = sshll.u32 [#allocation9], 4
      %s2387 = int_to_ptr.vmem [resolvable:$true] %s2386
      %s2388 = sshll.u32 %s14, 4
      %s2389 = int_to_ptr.hbm [resolvable:$true] %s2388
      %2394 = dma.vmem_to_hbm [thread:$0]  %s2387, 64, %s2389, [#allocation10], 32, 32, 2
    $region73: #{decoder_forward.1} parent=1 // pred_fallthru
      _
    // Predicated region
    $region74: #{decoder_forward.1} parent=1 // pred_check
      _
    $region75: #{decoder_forward.1} parent=1 // pred_check_branch
      %2396 = sbr.rel (0) target = $region77
    $region76: #{decoder_forward.1} parent=1 // pred_region
      %2398 = dma.done [#allocation4], 256
    $region77: #{decoder_forward.1} parent=1 // pred_fallthru
      _
    // Predicated region
    $region78: #{decoder_forward.1} parent=1 // pred_check
      _
    $region79: #{decoder_forward.1} parent=1 // pred_check_branch
      %2400 = sbr.rel (0) target = $region81
    $region80: #{decoder_forward.1} parent=1 // pred_region
      %2402 = dma.done [#allocation10], 64
    $region81: #{decoder_forward.1} parent=1 // pred_fallthru
      _
    %2403 = vsyncpa [#allocation3], 1
    %2404 = vsyncpa [#allocation6], 1
    %2405 = vsyncpa [#allocation4], 1
    %2406 = vsyncpa [#allocation10], 1

</llo_original>
